<compile_context>
chip_gen: v6e
topology: v6e:2x2x1
jax: 0.10.0
libtpu: 0.0.40
codegen_flags: <defaults>
</compile_context>

<pallas_src>
import jax
import jax.numpy as jnp
import numpy as np
from jax.experimental import pallas as pl
from jax.experimental.pallas import tpu as pltpu


IN_FEATURES = 50 * 50        # 2500
HIDDEN = 121
HIDDEN_PAD = 128             # lane-aligned hidden width
OUT_FEATURES = 2500
OUT_PAD = 2560               # 20 * 128, lane-dense output width
BATCH_PAD = 8                # sublane count


# ----------------------------- Pallas kernel ------------------------------- #

def dense_ae_kernel(x_ref, we_ref, be_ref, wd_ref, bd_ref, out_ref):
    """Fused encoder+decoder:  out = (x @ We + be) @ Wd + bd.

    x_ref:   (Bp, 2500)   f32
    we_ref:  (2500, 128)  f32  (encoder weight, hidden 121 -> 128 zero-padded)
    be_ref:  (1, 128)     f32
    wd_ref:  (128, 2560)  f32  (decoder weight, out 2500 -> 2560 zero-padded)
    bd_ref:  (1, 2560)    f32
    out_ref: (Bp, 2560)   f32
    """
    h = jnp.dot(x_ref[...], we_ref[...], preferred_element_type=jnp.float32)
    h = h + be_ref[...]                                  # broadcast over rows
    out = jnp.dot(h, wd_ref[...], preferred_element_type=jnp.float32)
    out_ref[...] = (out + bd_ref[...]).astype(out_ref.dtype)


# -------------------------------- wrapper ----------------------------------- #

def dense_autoencoder_forward(x, w_enc, b_enc, w_dec, b_dec):
    """x: (B, 2500).  Weights stored (in_features, out_features) = PyTorch W.T."""
    B, f_in = x.shape
    assert f_in == IN_FEATURES
    assert w_enc.shape == (IN_FEATURES, HIDDEN)
    assert w_dec.shape == (HIDDEN, OUT_FEATURES)

    # One-time layout plumbing: zero-pad to sublane/lane-aligned shapes.
    bp = max(BATCH_PAD, ((B + 7) // 8) * 8)
    x_p = jnp.zeros((bp, IN_FEATURES), jnp.float32).at[:B].set(
        x.astype(jnp.float32))
    we_p = jnp.zeros((IN_FEATURES, HIDDEN_PAD), jnp.float32).at[:, :HIDDEN].set(
        w_enc.astype(jnp.float32))
    be_p = jnp.zeros((1, HIDDEN_PAD), jnp.float32).at[:, :HIDDEN].set(
        b_enc.astype(jnp.float32)[None, :])
    wd_p = jnp.zeros((HIDDEN_PAD, OUT_PAD), jnp.float32).at[
        :HIDDEN, :OUT_FEATURES].set(w_dec.astype(jnp.float32))
    bd_p = jnp.zeros((1, OUT_PAD), jnp.float32).at[:, :OUT_FEATURES].set(
        b_dec.astype(jnp.float32)[None, :])

    # Single fused kernel: whole operands fit comfortably in VMEM
    # (~2.7 MiB of weights + ~0.2 MiB activations), so no grid is used —
    # one launch, zero intermediate HBM traffic.
    out_p = pl.pallas_call(
        dense_ae_kernel,
        out_shape=jax.ShapeDtypeStruct((bp, OUT_PAD), jnp.float32),
        compiler_params=pltpu.CompilerParams(vmem_limit_bytes=32 * 1024 * 1024),
    )(x_p, we_p, be_p, wd_p, bd_p)

    # Slice padding back off.
    return out_p[:B, :OUT_FEATURES]


# --------------------------- pure-JAX reference ----------------------------- #

def dense_autoencoder_reference(x, w_enc, b_enc, w_dec, b_dec):
    h = x @ w_enc + b_enc
    return h @ w_dec + b_dec


# ---------------------------------- main ------------------------------------ #

if __name__ == "__main__":
    B = 2
    key = jax.random.PRNGKey(0)
    k1, k2, k3, k4, k5 = jax.random.split(key, 5)

    # PyTorch nn.Linear default init: U(-1/sqrt(fan_in), 1/sqrt(fan_in)).
    s_e = 1.0 / np.sqrt(IN_FEATURES)
    s_d = 1.0 / np.sqrt(HIDDEN)
    w_enc = jax.random.uniform(k1, (IN_FEATURES, HIDDEN), jnp.float32, -s_e, s_e)
    b_enc = jax.random.uniform(k2, (HIDDEN,), jnp.float32, -s_e, s_e)
    w_dec = jax.random.uniform(k3, (HIDDEN, OUT_FEATURES), jnp.float32, -s_d, s_d)
    b_dec = jax.random.uniform(k4, (OUT_FEATURES,), jnp.float32, -s_d, s_d)
    x = jax.random.normal(k5, (B, IN_FEATURES), jnp.float32)

    fwd = jax.jit(dense_autoencoder_forward)
    out = jax.block_until_ready(fwd(x, w_enc, b_enc, w_dec, b_dec))
    ref = jax.block_until_ready(
        dense_autoencoder_reference(x, w_enc, b_enc, w_dec, b_dec))

    assert out.shape == (B, OUT_FEATURES)
    np.testing.assert_allclose(np.asarray(out), np.asarray(ref),
                               rtol=2e-3, atol=2e-3)
    print("KERNEL_OK")
</pallas_src>

<mosaic_0001>
module attributes {stable_mosaic.version = 11 : i64} {
  func.func @dense_ae_kernel(%arg0: memref<8x2500xf32, #tpu.memory_space<vmem>>, %arg1: memref<2500x128xf32, #tpu.memory_space<vmem>>, %arg2: memref<1x128xf32, #tpu.memory_space<vmem>>, %arg3: memref<128x2560xf32, #tpu.memory_space<vmem>>, %arg4: memref<1x2560xf32, #tpu.memory_space<vmem>>, %arg5: memref<8x2560xf32, #tpu.memory_space<vmem>>) attributes {dimension_semantics = [], scalar_prefetch = 0 : i64, scratch_operands = 0 : i64, tpu.core_type = #tpu.core_type<tc>} {
    %c0 = arith.constant 0 : index
    %c0_0 = arith.constant 0 : index
    %0 = vector.load %arg0[%c0, %c0_0] : memref<8x2500xf32, #tpu.memory_space<vmem>>, vector<8x2500xf32>
    %c0_1 = arith.constant 0 : index
    %c0_2 = arith.constant 0 : index
    %1 = vector.load %arg1[%c0_1, %c0_2] : memref<2500x128xf32, #tpu.memory_space<vmem>>, vector<2500x128xf32>
    %cst = arith.constant dense<0.000000e+00> : vector<8x128xf32>
    %2 = tpu.matmul %0, %1, %cst {dimension_numbers = #tpu.dot_dimension_numbers<[1], [0], [0], [1], [0, 0, 1, 1], [], []>} : vector<8x2500xf32>, vector<2500x128xf32>, vector<8x128xf32> -> vector<8x128xf32>
    %c0_3 = arith.constant 0 : index
    %c0_4 = arith.constant 0 : index
    %3 = vector.load %arg2[%c0_3, %c0_4] : memref<1x128xf32, #tpu.memory_space<vmem>>, vector<1x128xf32>
    %4 = vector.broadcast %3 : vector<1x128xf32> to vector<8x128xf32>
    %5 = arith.addf %2, %4 : vector<8x128xf32>
    %c0_5 = arith.constant 0 : index
    %c0_6 = arith.constant 0 : index
    %6 = vector.load %arg3[%c0_5, %c0_6] : memref<128x2560xf32, #tpu.memory_space<vmem>>, vector<128x2560xf32>
    %cst_7 = arith.constant dense<0.000000e+00> : vector<8x2560xf32>
    %7 = tpu.matmul %5, %6, %cst_7 {dimension_numbers = #tpu.dot_dimension_numbers<[1], [0], [0], [1], [0, 0, 1, 1], [], []>} : vector<8x128xf32>, vector<128x2560xf32>, vector<8x2560xf32> -> vector<8x2560xf32>
    %c0_8 = arith.constant 0 : index
    %c0_9 = arith.constant 0 : index
    %8 = vector.load %arg4[%c0_8, %c0_9] : memref<1x2560xf32, #tpu.memory_space<vmem>>, vector<1x2560xf32>
    %9 = vector.broadcast %8 : vector<1x2560xf32> to vector<8x2560xf32>
    %10 = arith.addf %7, %9 : vector<8x2560xf32>
    %c0_10 = arith.constant 0 : index
    %c0_11 = arith.constant 0 : index
    %11 = vector.load %arg5[%c0_10, %c0_11] : memref<8x2560xf32, #tpu.memory_space<vmem>>, vector<8x2560xf32>
    tpu.vector_store %arg5[%c0_10, %c0_11], %10 {strides = array<i32>} : memref<8x2560xf32, #tpu.memory_space<vmem>>, vector<8x2560xf32>,
    return
  }
}

</mosaic_0001>

<llo_original>
// kernel: dense_autoencoder_forward.1
$region0: #{dense_autoencoder_forward.1}
  #allocation0 [shape = 'u32[]', space=smem, size = 0x4, offset = 0x4, fixed_abs, tag = 'smem constant byte address 0x4 - core index']
  #allocation1 [shape = 'u32[144,128]{1,0:T(1,128)}', space=vmem, size = 0x12000, scoped, tag = 'internal scratch']
  %s0 = inlined_call_operand.vmem [shape: f32[8,2500], index: 0, kind: input, shape index: {}]
  %s1 = inlined_call_operand.vmem [shape: f32[2500,128], index: 1, kind: input, shape index: {}]
  %s2 = inlined_call_operand.vmem [shape: f32[1,128], index: 2, kind: input, shape index: {}]
  %s3 = inlined_call_operand.vmem [shape: f32[128,2560], index: 3, kind: input, shape index: {}]
  %s4 = inlined_call_operand.vmem [shape: f32[1,2560], index: 4, kind: input, shape index: {}]
  %s5 = inlined_call_operand.vmem [shape: f32[8,2560], index: 5, kind: output, shape index: {}]
  %s6 = sld [smem:[#allocation0]]
  $region30: #{dense_autoencoder_forward.1} parent=0
    _
  %s8 = ssub.s32 1, %s6
  %s9 = scalar_select 0, %s8, %s6
  // Predicated region
  $region2: #{dense_autoencoder_forward.1} parent=0 // pred_check
    _
  $region3: #{dense_autoencoder_forward.1} parent=0 // pred_check_branch
    %11 = sbr.rel (0) target = $region5
  $region4: #{dense_autoencoder_forward.1} parent=0 // pred_region
    _
  $region5: #{dense_autoencoder_forward.1} parent=0 // pred_fallthru
    _
  // Predicated region
  $region6: #{dense_autoencoder_forward.1} parent=0 // pred_check
    _
  $region7: #{dense_autoencoder_forward.1} parent=0 // pred_check_branch
    %13 = sbr.rel (0) target = $region9
  $region8: #{dense_autoencoder_forward.1} parent=0 // pred_region
    _
  $region9: #{dense_autoencoder_forward.1} parent=0 // pred_fallthru
    _
  // Predicated region
  $region10: #{dense_autoencoder_forward.1} parent=0 // pred_check
    _
  $region11: #{dense_autoencoder_forward.1} parent=0 // pred_check_branch
    %15 = sbr.rel (0) target = $region13
  $region12: #{dense_autoencoder_forward.1} parent=0 // pred_region
    _
  $region13: #{dense_autoencoder_forward.1} parent=0 // pred_fallthru
    _
  // Predicated region
  $region14: #{dense_autoencoder_forward.1} parent=0 // pred_check
    _
  $region15: #{dense_autoencoder_forward.1} parent=0 // pred_check_branch
    %17 = sbr.rel (0) target = $region17
  $region16: #{dense_autoencoder_forward.1} parent=0 // pred_region
    _
  $region17: #{dense_autoencoder_forward.1} parent=0 // pred_fallthru
    _
  // Predicated region
  $region18: #{dense_autoencoder_forward.1} parent=0 // pred_check
    _
  $region19: #{dense_autoencoder_forward.1} parent=0 // pred_check_branch
    %19 = sbr.rel (0) target = $region21
  $region20: #{dense_autoencoder_forward.1} parent=0 // pred_region
    _
  $region21: #{dense_autoencoder_forward.1} parent=0 // pred_fallthru
    _
  %v20 = vld [vmem:[%s0] sm:$0xff]
  %v21 = vld [vmem:[%s0 + $0x8] sm:$0xff]
  %v22 = vld [vmem:[%s0 + $0x10] sm:$0xff]
  %v23 = vld [vmem:[%s0 + $0x18] sm:$0xff]
  %v24 = vld [vmem:[%s0 + $0x20] sm:$0xff]
  %v25 = vld [vmem:[%s0 + $0x28] sm:$0xff]
  %v26 = vld [vmem:[%s0 + $0x30] sm:$0xff]
  %v27 = vld [vmem:[%s0 + $0x38] sm:$0xff]
  %v28 = vld [vmem:[%s0 + $0x40] sm:$0xff]
  %v29 = vld [vmem:[%s0 + $0x48] sm:$0xff]
  %v30 = vld [vmem:[%s0 + $0x50] sm:$0xff]
  %v31 = vld [vmem:[%s0 + $0x58] sm:$0xff]
  %v32 = vld [vmem:[%s0 + $0x60] sm:$0xff]
  %v33 = vld [vmem:[%s0 + $0x68] sm:$0xff]
  %v34 = vld [vmem:[%s0 + $0x70] sm:$0xff]
  %v35 = vld [vmem:[%s0 + $0x78] sm:$0xff]
  %v36 = vld [vmem:[%s0 + $0x80] sm:$0xff]
  %v37 = vld [vmem:[%s0 + $0x88] sm:$0xff]
  %v38 = vld [vmem:[%s0 + $0x90] sm:$0xff]
  %v39 = vld [vmem:[%s0 + $0x98] sm:$0xff]
  %v40 = vld [vmem:[%s1] sm:$0xff]
  %v41 = vld [vmem:[%s1 + $0x8] sm:$0xff]
  %v42 = vld [vmem:[%s1 + $0x10] sm:$0xff]
  %v43 = vld [vmem:[%s1 + $0x18] sm:$0xff]
  %v44 = vld [vmem:[%s1 + $0x20] sm:$0xff]
  %v45 = vld [vmem:[%s1 + $0x28] sm:$0xff]
  %v46 = vld [vmem:[%s1 + $0x30] sm:$0xff]
  %v47 = vld [vmem:[%s1 + $0x38] sm:$0xff]
  %v48 = vld [vmem:[%s1 + $0x40] sm:$0xff]
  %v49 = vld [vmem:[%s1 + $0x48] sm:$0xff]
  %v50 = vld [vmem:[%s1 + $0x50] sm:$0xff]
  %v51 = vld [vmem:[%s1 + $0x58] sm:$0xff]
  %v52 = vld [vmem:[%s1 + $0x60] sm:$0xff]
  %v53 = vld [vmem:[%s1 + $0x68] sm:$0xff]
  %v54 = vld [vmem:[%s1 + $0x70] sm:$0xff]
  %v55 = vld [vmem:[%s1 + $0x78] sm:$0xff]
  %v56 = vld [vmem:[%s1 + $0x80] sm:$0xff]
  %v57 = vld [vmem:[%s1 + $0x88] sm:$0xff]
  %v58 = vld [vmem:[%s1 + $0x90] sm:$0xff]
  %v59 = vld [vmem:[%s1 + $0x98] sm:$0xff]
  %v60 = vld [vmem:[%s1 + $0xa0] sm:$0xff]
  %v61 = vld [vmem:[%s1 + $0xa8] sm:$0xff]
  %v62 = vld [vmem:[%s1 + $0xb0] sm:$0xff]
  %v63 = vld [vmem:[%s1 + $0xb8] sm:$0xff]
  %v64 = vld [vmem:[%s1 + $0xc0] sm:$0xff]
  %v65 = vld [vmem:[%s1 + $0xc8] sm:$0xff]
  %v66 = vld [vmem:[%s1 + $0xd0] sm:$0xff]
  %v67 = vld [vmem:[%s1 + $0xd8] sm:$0xff]
  %v68 = vld [vmem:[%s1 + $0xe0] sm:$0xff]
  %v69 = vld [vmem:[%s1 + $0xe8] sm:$0xff]
  %v70 = vld [vmem:[%s1 + $0xf0] sm:$0xff]
  %v71 = vld [vmem:[%s1 + $0xf8] sm:$0xff]
  %v72 = vld [vmem:[%s1 + $0x100] sm:$0xff]
  %v73 = vld [vmem:[%s1 + $0x108] sm:$0xff]
  %v74 = vld [vmem:[%s1 + $0x110] sm:$0xff]
  %v75 = vld [vmem:[%s1 + $0x118] sm:$0xff]
  %v76 = vld [vmem:[%s1 + $0x120] sm:$0xff]
  %v77 = vld [vmem:[%s1 + $0x128] sm:$0xff]
  %v78 = vld [vmem:[%s1 + $0x130] sm:$0xff]
  %v79 = vld [vmem:[%s1 + $0x138] sm:$0xff]
  %v80 = vld [vmem:[%s1 + $0x140] sm:$0xff]
  %v81 = vld [vmem:[%s1 + $0x148] sm:$0xff]
  %v82 = vld [vmem:[%s1 + $0x150] sm:$0xff]
  %v83 = vld [vmem:[%s1 + $0x158] sm:$0xff]
  %v84 = vld [vmem:[%s1 + $0x160] sm:$0xff]
  %v85 = vld [vmem:[%s1 + $0x168] sm:$0xff]
  %v86 = vld [vmem:[%s1 + $0x170] sm:$0xff]
  %v87 = vld [vmem:[%s1 + $0x178] sm:$0xff]
  %v88 = vld [vmem:[%s1 + $0x180] sm:$0xff]
  %v89 = vld [vmem:[%s1 + $0x188] sm:$0xff]
  %v90 = vld [vmem:[%s1 + $0x190] sm:$0xff]
  %v91 = vld [vmem:[%s1 + $0x198] sm:$0xff]
  %v92 = vld [vmem:[%s1 + $0x1a0] sm:$0xff]
  %v93 = vld [vmem:[%s1 + $0x1a8] sm:$0xff]
  %v94 = vld [vmem:[%s1 + $0x1b0] sm:$0xff]
  %v95 = vld [vmem:[%s1 + $0x1b8] sm:$0xff]
  %v96 = vld [vmem:[%s1 + $0x1c0] sm:$0xff]
  %v97 = vld [vmem:[%s1 + $0x1c8] sm:$0xff]
  %v98 = vld [vmem:[%s1 + $0x1d0] sm:$0xff]
  %v99 = vld [vmem:[%s1 + $0x1d8] sm:$0xff]
  %v100 = vld [vmem:[%s1 + $0x1e0] sm:$0xff]
  %v101 = vld [vmem:[%s1 + $0x1e8] sm:$0xff]
  %v102 = vld [vmem:[%s1 + $0x1f0] sm:$0xff]
  %v103 = vld [vmem:[%s1 + $0x1f8] sm:$0xff]
  %v104 = vld [vmem:[%s1 + $0x200] sm:$0xff]
  %v105 = vld [vmem:[%s1 + $0x208] sm:$0xff]
  %v106 = vld [vmem:[%s1 + $0x210] sm:$0xff]
  %v107 = vld [vmem:[%s1 + $0x218] sm:$0xff]
  %v108 = vld [vmem:[%s1 + $0x220] sm:$0xff]
  %v109 = vld [vmem:[%s1 + $0x228] sm:$0xff]
  %v110 = vld [vmem:[%s1 + $0x230] sm:$0xff]
  %v111 = vld [vmem:[%s1 + $0x238] sm:$0xff]
  %v112 = vld [vmem:[%s1 + $0x240] sm:$0xff]
  %v113 = vld [vmem:[%s1 + $0x248] sm:$0xff]
  %v114 = vld [vmem:[%s1 + $0x250] sm:$0xff]
  %v115 = vld [vmem:[%s1 + $0x258] sm:$0xff]
  %v116 = vld [vmem:[%s1 + $0x260] sm:$0xff]
  %v117 = vld [vmem:[%s1 + $0x268] sm:$0xff]
  %v118 = vld [vmem:[%s1 + $0x270] sm:$0xff]
  %v119 = vld [vmem:[%s1 + $0x278] sm:$0xff]
  %v120 = vld [vmem:[%s1 + $0x280] sm:$0xff]
  %v121 = vld [vmem:[%s1 + $0x288] sm:$0xff]
  %v122 = vld [vmem:[%s1 + $0x290] sm:$0xff]
  %v123 = vld [vmem:[%s1 + $0x298] sm:$0xff]
  %v124 = vld [vmem:[%s1 + $0x2a0] sm:$0xff]
  %v125 = vld [vmem:[%s1 + $0x2a8] sm:$0xff]
  %v126 = vld [vmem:[%s1 + $0x2b0] sm:$0xff]
  %v127 = vld [vmem:[%s1 + $0x2b8] sm:$0xff]
  %v128 = vld [vmem:[%s1 + $0x2c0] sm:$0xff]
  %v129 = vld [vmem:[%s1 + $0x2c8] sm:$0xff]
  %v130 = vld [vmem:[%s1 + $0x2d0] sm:$0xff]
  %v131 = vld [vmem:[%s1 + $0x2d8] sm:$0xff]
  %v132 = vld [vmem:[%s1 + $0x2e0] sm:$0xff]
  %v133 = vld [vmem:[%s1 + $0x2e8] sm:$0xff]
  %v134 = vld [vmem:[%s1 + $0x2f0] sm:$0xff]
  %v135 = vld [vmem:[%s1 + $0x2f8] sm:$0xff]
  %v136 = vld [vmem:[%s1 + $0x300] sm:$0xff]
  %v137 = vld [vmem:[%s1 + $0x308] sm:$0xff]
  %v138 = vld [vmem:[%s1 + $0x310] sm:$0xff]
  %v139 = vld [vmem:[%s1 + $0x318] sm:$0xff]
  %v140 = vld [vmem:[%s1 + $0x320] sm:$0xff]
  %v141 = vld [vmem:[%s1 + $0x328] sm:$0xff]
  %v142 = vld [vmem:[%s1 + $0x330] sm:$0xff]
  %v143 = vld [vmem:[%s1 + $0x338] sm:$0xff]
  %v144 = vld [vmem:[%s1 + $0x340] sm:$0xff]
  %v145 = vld [vmem:[%s1 + $0x348] sm:$0xff]
  %v146 = vld [vmem:[%s1 + $0x350] sm:$0xff]
  %v147 = vld [vmem:[%s1 + $0x358] sm:$0xff]
  %v148 = vld [vmem:[%s1 + $0x360] sm:$0xff]
  %v149 = vld [vmem:[%s1 + $0x368] sm:$0xff]
  %v150 = vld [vmem:[%s1 + $0x370] sm:$0xff]
  %v151 = vld [vmem:[%s1 + $0x378] sm:$0xff]
  %v152 = vld [vmem:[%s1 + $0x380] sm:$0xff]
  %v153 = vld [vmem:[%s1 + $0x388] sm:$0xff]
  %v154 = vld [vmem:[%s1 + $0x390] sm:$0xff]
  %v155 = vld [vmem:[%s1 + $0x398] sm:$0xff]
  %v156 = vld [vmem:[%s1 + $0x3a0] sm:$0xff]
  %v157 = vld [vmem:[%s1 + $0x3a8] sm:$0xff]
  %v158 = vld [vmem:[%s1 + $0x3b0] sm:$0xff]
  %v159 = vld [vmem:[%s1 + $0x3b8] sm:$0xff]
  %v160 = vld [vmem:[%s1 + $0x3c0] sm:$0xff]
  %v161 = vld [vmem:[%s1 + $0x3c8] sm:$0xff]
  %v162 = vld [vmem:[%s1 + $0x3d0] sm:$0xff]
  %v163 = vld [vmem:[%s1 + $0x3d8] sm:$0xff]
  %v164 = vld [vmem:[%s1 + $0x3e0] sm:$0xff]
  %v165 = vld [vmem:[%s1 + $0x3e8] sm:$0xff]
  %v166 = vld [vmem:[%s1 + $0x3f0] sm:$0xff]
  %v167 = vld [vmem:[%s1 + $0x3f8] sm:$0xff]
  %v168 = vld [vmem:[%s1 + $0x400] sm:$0xff]
  %v169 = vld [vmem:[%s1 + $0x408] sm:$0xff]
  %v170 = vld [vmem:[%s1 + $0x410] sm:$0xff]
  %v171 = vld [vmem:[%s1 + $0x418] sm:$0xff]
  %v172 = vld [vmem:[%s1 + $0x420] sm:$0xff]
  %v173 = vld [vmem:[%s1 + $0x428] sm:$0xff]
  %v174 = vld [vmem:[%s1 + $0x430] sm:$0xff]
  %v175 = vld [vmem:[%s1 + $0x438] sm:$0xff]
  %v176 = vld [vmem:[%s1 + $0x440] sm:$0xff]
  %v177 = vld [vmem:[%s1 + $0x448] sm:$0xff]
  %v178 = vld [vmem:[%s1 + $0x450] sm:$0xff]
  %v179 = vld [vmem:[%s1 + $0x458] sm:$0xff]
  %v180 = vld [vmem:[%s1 + $0x460] sm:$0xff]
  %v181 = vld [vmem:[%s1 + $0x468] sm:$0xff]
  %v182 = vld [vmem:[%s1 + $0x470] sm:$0xff]
  %v183 = vld [vmem:[%s1 + $0x478] sm:$0xff]
  %v184 = vld [vmem:[%s1 + $0x480] sm:$0xff]
  %v185 = vld [vmem:[%s1 + $0x488] sm:$0xff]
  %v186 = vld [vmem:[%s1 + $0x490] sm:$0xff]
  %v187 = vld [vmem:[%s1 + $0x498] sm:$0xff]
  %v188 = vld [vmem:[%s1 + $0x4a0] sm:$0xff]
  %v189 = vld [vmem:[%s1 + $0x4a8] sm:$0xff]
  %v190 = vld [vmem:[%s1 + $0x4b0] sm:$0xff]
  %v191 = vld [vmem:[%s1 + $0x4b8] sm:$0xff]
  %v192 = vld [vmem:[%s1 + $0x4c0] sm:$0xff]
  %v193 = vld [vmem:[%s1 + $0x4c8] sm:$0xff]
  %v194 = vld [vmem:[%s1 + $0x4d0] sm:$0xff]
  %v195 = vld [vmem:[%s1 + $0x4d8] sm:$0xff]
  %v196 = vld [vmem:[%s1 + $0x4e0] sm:$0xff]
  %v197 = vld [vmem:[%s1 + $0x4e8] sm:$0xff]
  %v198 = vld [vmem:[%s1 + $0x4f0] sm:$0xff]
  %v199 = vld [vmem:[%s1 + $0x4f8] sm:$0xff]
  %v200 = vld [vmem:[%s1 + $0x500] sm:$0xff]
  %v201 = vld [vmem:[%s1 + $0x508] sm:$0xff]
  %v202 = vld [vmem:[%s1 + $0x510] sm:$0xff]
  %v203 = vld [vmem:[%s1 + $0x518] sm:$0xff]
  %v204 = vld [vmem:[%s1 + $0x520] sm:$0xff]
  %v205 = vld [vmem:[%s1 + $0x528] sm:$0xff]
  %v206 = vld [vmem:[%s1 + $0x530] sm:$0xff]
  %v207 = vld [vmem:[%s1 + $0x538] sm:$0xff]
  %v208 = vld [vmem:[%s1 + $0x540] sm:$0xff]
  %v209 = vld [vmem:[%s1 + $0x548] sm:$0xff]
  %v210 = vld [vmem:[%s1 + $0x550] sm:$0xff]
  %v211 = vld [vmem:[%s1 + $0x558] sm:$0xff]
  %v212 = vld [vmem:[%s1 + $0x560] sm:$0xff]
  %v213 = vld [vmem:[%s1 + $0x568] sm:$0xff]
  %v214 = vld [vmem:[%s1 + $0x570] sm:$0xff]
  %v215 = vld [vmem:[%s1 + $0x578] sm:$0xff]
  %v216 = vld [vmem:[%s1 + $0x580] sm:$0xff]
  %v217 = vld [vmem:[%s1 + $0x588] sm:$0xff]
  %v218 = vld [vmem:[%s1 + $0x590] sm:$0xff]
  %v219 = vld [vmem:[%s1 + $0x598] sm:$0xff]
  %v220 = vld [vmem:[%s1 + $0x5a0] sm:$0xff]
  %v221 = vld [vmem:[%s1 + $0x5a8] sm:$0xff]
  %v222 = vld [vmem:[%s1 + $0x5b0] sm:$0xff]
  %v223 = vld [vmem:[%s1 + $0x5b8] sm:$0xff]
  %v224 = vld [vmem:[%s1 + $0x5c0] sm:$0xff]
  %v225 = vld [vmem:[%s1 + $0x5c8] sm:$0xff]
  %v226 = vld [vmem:[%s1 + $0x5d0] sm:$0xff]
  %v227 = vld [vmem:[%s1 + $0x5d8] sm:$0xff]
  %v228 = vld [vmem:[%s1 + $0x5e0] sm:$0xff]
  %v229 = vld [vmem:[%s1 + $0x5e8] sm:$0xff]
  %v230 = vld [vmem:[%s1 + $0x5f0] sm:$0xff]
  %v231 = vld [vmem:[%s1 + $0x5f8] sm:$0xff]
  %v232 = vld [vmem:[%s1 + $0x600] sm:$0xff]
  %v233 = vld [vmem:[%s1 + $0x608] sm:$0xff]
  %v234 = vld [vmem:[%s1 + $0x610] sm:$0xff]
  %v235 = vld [vmem:[%s1 + $0x618] sm:$0xff]
  %v236 = vld [vmem:[%s1 + $0x620] sm:$0xff]
  %v237 = vld [vmem:[%s1 + $0x628] sm:$0xff]
  %v238 = vld [vmem:[%s1 + $0x630] sm:$0xff]
  %v239 = vld [vmem:[%s1 + $0x638] sm:$0xff]
  %v240 = vld [vmem:[%s1 + $0x640] sm:$0xff]
  %v241 = vld [vmem:[%s1 + $0x648] sm:$0xff]
  %v242 = vld [vmem:[%s1 + $0x650] sm:$0xff]
  %v243 = vld [vmem:[%s1 + $0x658] sm:$0xff]
  %v244 = vld [vmem:[%s1 + $0x660] sm:$0xff]
  %v245 = vld [vmem:[%s1 + $0x668] sm:$0xff]
  %v246 = vld [vmem:[%s1 + $0x670] sm:$0xff]
  %v247 = vld [vmem:[%s1 + $0x678] sm:$0xff]
  %v248 = vld [vmem:[%s1 + $0x680] sm:$0xff]
  %v249 = vld [vmem:[%s1 + $0x688] sm:$0xff]
  %v250 = vld [vmem:[%s1 + $0x690] sm:$0xff]
  %v251 = vld [vmem:[%s1 + $0x698] sm:$0xff]
  %v252 = vld [vmem:[%s1 + $0x6a0] sm:$0xff]
  %v253 = vld [vmem:[%s1 + $0x6a8] sm:$0xff]
  %v254 = vld [vmem:[%s1 + $0x6b0] sm:$0xff]
  %v255 = vld [vmem:[%s1 + $0x6b8] sm:$0xff]
  %v256 = vld [vmem:[%s1 + $0x6c0] sm:$0xff]
  %v257 = vld [vmem:[%s1 + $0x6c8] sm:$0xff]
  %v258 = vld [vmem:[%s1 + $0x6d0] sm:$0xff]
  %v259 = vld [vmem:[%s1 + $0x6d8] sm:$0xff]
  %v260 = vld [vmem:[%s1 + $0x6e0] sm:$0xff]
  %v261 = vld [vmem:[%s1 + $0x6e8] sm:$0xff]
  %v262 = vld [vmem:[%s1 + $0x6f0] sm:$0xff]
  %v263 = vld [vmem:[%s1 + $0x6f8] sm:$0xff]
  %v264 = vld [vmem:[%s1 + $0x700] sm:$0xff]
  %v265 = vld [vmem:[%s1 + $0x708] sm:$0xff]
  %v266 = vld [vmem:[%s1 + $0x710] sm:$0xff]
  %v267 = vld [vmem:[%s1 + $0x718] sm:$0xff]
  %v268 = vld [vmem:[%s1 + $0x720] sm:$0xff]
  %v269 = vld [vmem:[%s1 + $0x728] sm:$0xff]
  %v270 = vld [vmem:[%s1 + $0x730] sm:$0xff]
  %v271 = vld [vmem:[%s1 + $0x738] sm:$0xff]
  %v272 = vld [vmem:[%s1 + $0x740] sm:$0xff]
  %v273 = vld [vmem:[%s1 + $0x748] sm:$0xff]
  %v274 = vld [vmem:[%s1 + $0x750] sm:$0xff]
  %v275 = vld [vmem:[%s1 + $0x758] sm:$0xff]
  %v276 = vld [vmem:[%s1 + $0x760] sm:$0xff]
  %v277 = vld [vmem:[%s1 + $0x768] sm:$0xff]
  %v278 = vld [vmem:[%s1 + $0x770] sm:$0xff]
  %v279 = vld [vmem:[%s1 + $0x778] sm:$0xff]
  %v280 = vld [vmem:[%s1 + $0x780] sm:$0xff]
  %v281 = vld [vmem:[%s1 + $0x788] sm:$0xff]
  %v282 = vld [vmem:[%s1 + $0x790] sm:$0xff]
  %v283 = vld [vmem:[%s1 + $0x798] sm:$0xff]
  %v284 = vld [vmem:[%s1 + $0x7a0] sm:$0xff]
  %v285 = vld [vmem:[%s1 + $0x7a8] sm:$0xff]
  %v286 = vld [vmem:[%s1 + $0x7b0] sm:$0xff]
  %v287 = vld [vmem:[%s1 + $0x7b8] sm:$0xff]
  %v288 = vld [vmem:[%s1 + $0x7c0] sm:$0xff]
  %v289 = vld [vmem:[%s1 + $0x7c8] sm:$0xff]
  %v290 = vld [vmem:[%s1 + $0x7d0] sm:$0xff]
  %v291 = vld [vmem:[%s1 + $0x7d8] sm:$0xff]
  %v292 = vld [vmem:[%s1 + $0x7e0] sm:$0xff]
  %v293 = vld [vmem:[%s1 + $0x7e8] sm:$0xff]
  %v294 = vld [vmem:[%s1 + $0x7f0] sm:$0xff]
  %v295 = vld [vmem:[%s1 + $0x7f8] sm:$0xff]
  %v296 = vld [vmem:[%s1 + $0x800] sm:$0xff]
  %v297 = vld [vmem:[%s1 + $0x808] sm:$0xff]
  %v298 = vld [vmem:[%s1 + $0x810] sm:$0xff]
  %v299 = vld [vmem:[%s1 + $0x818] sm:$0xff]
  %v300 = vld [vmem:[%s1 + $0x820] sm:$0xff]
  %v301 = vld [vmem:[%s1 + $0x828] sm:$0xff]
  %v302 = vld [vmem:[%s1 + $0x830] sm:$0xff]
  %v303 = vld [vmem:[%s1 + $0x838] sm:$0xff]
  %v304 = vld [vmem:[%s1 + $0x840] sm:$0xff]
  %v305 = vld [vmem:[%s1 + $0x848] sm:$0xff]
  %v306 = vld [vmem:[%s1 + $0x850] sm:$0xff]
  %v307 = vld [vmem:[%s1 + $0x858] sm:$0xff]
  %v308 = vld [vmem:[%s1 + $0x860] sm:$0xff]
  %v309 = vld [vmem:[%s1 + $0x868] sm:$0xff]
  %v310 = vld [vmem:[%s1 + $0x870] sm:$0xff]
  %v311 = vld [vmem:[%s1 + $0x878] sm:$0xff]
  %v312 = vld [vmem:[%s1 + $0x880] sm:$0xff]
  %v313 = vld [vmem:[%s1 + $0x888] sm:$0xff]
  %v314 = vld [vmem:[%s1 + $0x890] sm:$0xff]
  %v315 = vld [vmem:[%s1 + $0x898] sm:$0xff]
  %v316 = vld [vmem:[%s1 + $0x8a0] sm:$0xff]
  %v317 = vld [vmem:[%s1 + $0x8a8] sm:$0xff]
  %v318 = vld [vmem:[%s1 + $0x8b0] sm:$0xff]
  %v319 = vld [vmem:[%s1 + $0x8b8] sm:$0xff]
  %v320 = vld [vmem:[%s1 + $0x8c0] sm:$0xff]
  %v321 = vld [vmem:[%s1 + $0x8c8] sm:$0xff]
  %v322 = vld [vmem:[%s1 + $0x8d0] sm:$0xff]
  %v323 = vld [vmem:[%s1 + $0x8d8] sm:$0xff]
  %v324 = vld [vmem:[%s1 + $0x8e0] sm:$0xff]
  %v325 = vld [vmem:[%s1 + $0x8e8] sm:$0xff]
  %v326 = vld [vmem:[%s1 + $0x8f0] sm:$0xff]
  %v327 = vld [vmem:[%s1 + $0x8f8] sm:$0xff]
  %v328 = vld [vmem:[%s1 + $0x900] sm:$0xff]
  %v329 = vld [vmem:[%s1 + $0x908] sm:$0xff]
  %v330 = vld [vmem:[%s1 + $0x910] sm:$0xff]
  %v331 = vld [vmem:[%s1 + $0x918] sm:$0xff]
  %v332 = vld [vmem:[%s1 + $0x920] sm:$0xff]
  %v333 = vld [vmem:[%s1 + $0x928] sm:$0xff]
  %v334 = vld [vmem:[%s1 + $0x930] sm:$0xff]
  %v335 = vld [vmem:[%s1 + $0x938] sm:$0xff]
  %v336 = vld [vmem:[%s1 + $0x940] sm:$0xff]
  %v337 = vld [vmem:[%s1 + $0x948] sm:$0xff]
  %v338 = vld [vmem:[%s1 + $0x950] sm:$0xff]
  %v339 = vld [vmem:[%s1 + $0x958] sm:$0xff]
  %v340 = vld [vmem:[%s1 + $0x960] sm:$0xff]
  %v341 = vld [vmem:[%s1 + $0x968] sm:$0xff]
  %v342 = vld [vmem:[%s1 + $0x970] sm:$0xff]
  %v343 = vld [vmem:[%s1 + $0x978] sm:$0xff]
  %v344 = vld [vmem:[%s1 + $0x980] sm:$0xff]
  %v345 = vld [vmem:[%s1 + $0x988] sm:$0xff]
  %v346 = vld [vmem:[%s1 + $0x990] sm:$0xff]
  %v347 = vld [vmem:[%s1 + $0x998] sm:$0xff]
  %v348 = vld [vmem:[%s1 + $0x9a0] sm:$0xff]
  %v349 = vld [vmem:[%s1 + $0x9a8] sm:$0xff]
  %v350 = vld [vmem:[%s1 + $0x9b0] sm:$0xff]
  %v351 = vld [vmem:[%s1 + $0x9b8] sm:$0xff]
  %v352 = vld [vmem:[%s1 + $0x9c0] sm:$0xf]
  %v353 = vld [vmem:[%s2] sm:$0x1]
  %v355 = vlaneseq
  %v356 = vshrl.u32 %v355, 7
  %v357 = vsub.s32 0, %v356
  %v358 = vrot.slane %v353, %v357
  %vm360 = vcmask 556032
  %v362 = vsel %vm360, %v39, 0
  %vm364 = vcmask 1043456
  %v366 = vsel %vm364, %v352, 0
  %368 = vmatprep.subr.mxu0 0.0
  %369 = vmatpush1.msra.mxu0 %v55
  %370 = vmatprep.subr.mxu0 0.0
  %371 = vmatpush1.msra.mxu0 %v54
  %372 = vmatprep.subr.mxu0 0.0
  %373 = vmatpush1.msra.mxu0 %v53
  %374 = vmatprep.subr.mxu0 0.0
  %375 = vmatpush1.msra.mxu0 %v52
  %376 = vmatprep.subr.mxu0 0.0
  %377 = vmatpush1.msra.mxu0 %v51
  %378 = vmatprep.subr.mxu0 0.0
  %379 = vmatpush1.msra.mxu0 %v50
  %380 = vmatprep.subr.mxu0 0.0
  %381 = vmatpush1.msra.mxu0 %v49
  %382 = vmatprep.subr.mxu0 0.0
  %383 = vmatpush1.msra.mxu0 %v48
  %384 = vmatprep.subr.mxu0 0.0
  %385 = vmatpush1.msra.mxu0 %v47
  %386 = vmatprep.subr.mxu0 0.0
  %387 = vmatpush1.msra.mxu0 %v46
  %388 = vmatprep.subr.mxu0 0.0
  %389 = vmatpush1.msra.mxu0 %v45
  %390 = vmatprep.subr.mxu0 0.0
  %391 = vmatpush1.msra.mxu0 %v44
  %392 = vmatprep.subr.mxu0 0.0
  %393 = vmatpush1.msra.mxu0 %v43
  %394 = vmatprep.subr.mxu0 0.0
  %395 = vmatpush1.msra.mxu0 %v42
  %396 = vmatprep.subr.mxu0 0.0
  %397 = vmatpush1.msra.mxu0 %v41
  %398 = vmatprep.subr.mxu0 0.0
  %399 = vmatpush1.msra.mxu0 %v40
  %400 = vmatprep.subr.mxu0 0.0
  %401 = vmatpush2.msra.mxu0 %v71
  %402 = vmatprep.subr.mxu0 0.0
  %403 = vmatpush2.msra.mxu0 %v70
  %404 = vmatprep.subr.mxu0 0.0
  %405 = vmatpush2.msra.mxu0 %v69
  %406 = vmatprep.subr.mxu0 0.0
  %407 = vmatpush2.msra.mxu0 %v68
  %408 = vmatprep.subr.mxu0 0.0
  %409 = vmatpush2.msra.mxu0 %v67
  %410 = vmatprep.subr.mxu0 0.0
  %411 = vmatpush2.msra.mxu0 %v66
  %412 = vmatprep.subr.mxu0 0.0
  %413 = vmatpush2.msra.mxu0 %v65
  %414 = vmatprep.subr.mxu0 0.0
  %415 = vmatpush2.msra.mxu0 %v64
  %416 = vmatprep.subr.mxu0 0.0
  %417 = vmatpush2.msra.mxu0 %v63
  %418 = vmatprep.subr.mxu0 0.0
  %419 = vmatpush2.msra.mxu0 %v62
  %420 = vmatprep.subr.mxu0 0.0
  %421 = vmatpush2.msra.mxu0 %v61
  %422 = vmatprep.subr.mxu0 0.0
  %423 = vmatpush2.msra.mxu0 %v60
  %424 = vmatprep.subr.mxu0 0.0
  %425 = vmatpush2.msra.mxu0 %v59
  %426 = vmatprep.subr.mxu0 0.0
  %427 = vmatpush2.msra.mxu0 %v58
  %428 = vmatprep.subr.mxu0 0.0
  %429 = vmatpush2.msra.mxu0 %v57
  %430 = vmatprep.subr.mxu0 0.0
  %431 = vmatpush2.msra.mxu0 %v56
  %432 = vmatprep.mubr.f32.mxu0 %v21
  %433 = vmatmul.mubr.f32.gmra.mxu0 %v20
  %v434 = vpop.f32.mrf.mxu0
  %v435 = vadd.f32 %v358, %v434
  %v436 = vpop.f32.mrf.mxu0
  %437 = vdwg.mxu0
  %438 = vmatprep.subr.mxu0 0.0
  %439 = vmatpush1.msra.mxu0 %v87
  %440 = vmatprep.subr.mxu0 0.0
  %441 = vmatpush1.msra.mxu0 %v86
  %442 = vmatprep.subr.mxu0 0.0
  %443 = vmatpush1.msra.mxu0 %v85
  %444 = vmatprep.subr.mxu0 0.0
  %445 = vmatpush1.msra.mxu0 %v84
  %446 = vmatprep.subr.mxu0 0.0
  %447 = vmatpush1.msra.mxu0 %v83
  %448 = vmatprep.subr.mxu0 0.0
  %449 = vmatpush1.msra.mxu0 %v82
  %450 = vmatprep.subr.mxu0 0.0
  %451 = vmatpush1.msra.mxu0 %v81
  %452 = vmatprep.subr.mxu0 0.0
  %453 = vmatpush1.msra.mxu0 %v80
  %454 = vmatprep.subr.mxu0 0.0
  %455 = vmatpush1.msra.mxu0 %v79
  %456 = vmatprep.subr.mxu0 0.0
  %457 = vmatpush1.msra.mxu0 %v78
  %458 = vmatprep.subr.mxu0 0.0
  %459 = vmatpush1.msra.mxu0 %v77
  %460 = vmatprep.subr.mxu0 0.0
  %461 = vmatpush1.msra.mxu0 %v76
  %462 = vmatprep.subr.mxu0 0.0
  %463 = vmatpush1.msra.mxu0 %v75
  %464 = vmatprep.subr.mxu0 0.0
  %465 = vmatpush1.msra.mxu0 %v74
  %466 = vmatprep.subr.mxu0 0.0
  %467 = vmatpush1.msra.mxu0 %v73
  %468 = vmatprep.subr.mxu0 0.0
  %469 = vmatpush1.msra.mxu0 %v72
  %470 = vmatprep.subr.mxu0 0.0
  %471 = vmatpush2.msra.mxu0 %v103
  %472 = vmatprep.subr.mxu0 0.0
  %473 = vmatpush2.msra.mxu0 %v102
  %474 = vmatprep.subr.mxu0 0.0
  %475 = vmatpush2.msra.mxu0 %v101
  %476 = vmatprep.subr.mxu0 0.0
  %477 = vmatpush2.msra.mxu0 %v100
  %478 = vmatprep.subr.mxu0 0.0
  %479 = vmatpush2.msra.mxu0 %v99
  %480 = vmatprep.subr.mxu0 0.0
  %481 = vmatpush2.msra.mxu0 %v98
  %482 = vmatprep.subr.mxu0 0.0
  %483 = vmatpush2.msra.mxu0 %v97
  %484 = vmatprep.subr.mxu0 0.0
  %485 = vmatpush2.msra.mxu0 %v96
  %486 = vmatprep.subr.mxu0 0.0
  %487 = vmatpush2.msra.mxu0 %v95
  %488 = vmatprep.subr.mxu0 0.0
  %489 = vmatpush2.msra.mxu0 %v94
  %490 = vmatprep.subr.mxu0 0.0
  %491 = vmatpush2.msra.mxu0 %v93
  %492 = vmatprep.subr.mxu0 0.0
  %493 = vmatpush2.msra.mxu0 %v92
  %494 = vmatprep.subr.mxu0 0.0
  %495 = vmatpush2.msra.mxu0 %v91
  %496 = vmatprep.subr.mxu0 0.0
  %497 = vmatpush2.msra.mxu0 %v90
  %498 = vmatprep.subr.mxu0 0.0
  %499 = vmatpush2.msra.mxu0 %v89
  %500 = vmatprep.subr.mxu0 0.0
  %501 = vmatpush2.msra.mxu0 %v88
  %502 = vmatprep.mubr.f32.mxu0 %v23
  %503 = vmatmul.mubr.f32.gmra.mxu0 %v22
  %v504 = vpop.f32.mrf.mxu0
  %v505 = vadd.f32 %v435, %v504
  %v506 = vpop.f32.mrf.mxu0
  %507 = vdwg.mxu0
  %508 = vmatprep.subr.mxu0 0.0
  %509 = vmatpush1.msra.mxu0 %v119
  %510 = vmatprep.subr.mxu0 0.0
  %511 = vmatpush1.msra.mxu0 %v118
  %512 = vmatprep.subr.mxu0 0.0
  %513 = vmatpush1.msra.mxu0 %v117
  %514 = vmatprep.subr.mxu0 0.0
  %515 = vmatpush1.msra.mxu0 %v116
  %516 = vmatprep.subr.mxu0 0.0
  %517 = vmatpush1.msra.mxu0 %v115
  %518 = vmatprep.subr.mxu0 0.0
  %519 = vmatpush1.msra.mxu0 %v114
  %520 = vmatprep.subr.mxu0 0.0
  %521 = vmatpush1.msra.mxu0 %v113
  %522 = vmatprep.subr.mxu0 0.0
  %523 = vmatpush1.msra.mxu0 %v112
  %524 = vmatprep.subr.mxu0 0.0
  %525 = vmatpush1.msra.mxu0 %v111
  %526 = vmatprep.subr.mxu0 0.0
  %527 = vmatpush1.msra.mxu0 %v110
  %528 = vmatprep.subr.mxu0 0.0
  %529 = vmatpush1.msra.mxu0 %v109
  %530 = vmatprep.subr.mxu0 0.0
  %531 = vmatpush1.msra.mxu0 %v108
  %532 = vmatprep.subr.mxu0 0.0
  %533 = vmatpush1.msra.mxu0 %v107
  %534 = vmatprep.subr.mxu0 0.0
  %535 = vmatpush1.msra.mxu0 %v106
  %536 = vmatprep.subr.mxu0 0.0
  %537 = vmatpush1.msra.mxu0 %v105
  %538 = vmatprep.subr.mxu0 0.0
  %539 = vmatpush1.msra.mxu0 %v104
  %540 = vmatprep.subr.mxu0 0.0
  %541 = vmatpush2.msra.mxu0 %v135
  %542 = vmatprep.subr.mxu0 0.0
  %543 = vmatpush2.msra.mxu0 %v134
  %544 = vmatprep.subr.mxu0 0.0
  %545 = vmatpush2.msra.mxu0 %v133
  %546 = vmatprep.subr.mxu0 0.0
  %547 = vmatpush2.msra.mxu0 %v132
  %548 = vmatprep.subr.mxu0 0.0
  %549 = vmatpush2.msra.mxu0 %v131
  %550 = vmatprep.subr.mxu0 0.0
  %551 = vmatpush2.msra.mxu0 %v130
  %552 = vmatprep.subr.mxu0 0.0
  %553 = vmatpush2.msra.mxu0 %v129
  %554 = vmatprep.subr.mxu0 0.0
  %555 = vmatpush2.msra.mxu0 %v128
  %556 = vmatprep.subr.mxu0 0.0
  %557 = vmatpush2.msra.mxu0 %v127
  %558 = vmatprep.subr.mxu0 0.0
  %559 = vmatpush2.msra.mxu0 %v126
  %560 = vmatprep.subr.mxu0 0.0
  %561 = vmatpush2.msra.mxu0 %v125
  %562 = vmatprep.subr.mxu0 0.0
  %563 = vmatpush2.msra.mxu0 %v124
  %564 = vmatprep.subr.mxu0 0.0
  %565 = vmatpush2.msra.mxu0 %v123
  %566 = vmatprep.subr.mxu0 0.0
  %567 = vmatpush2.msra.mxu0 %v122
  %568 = vmatprep.subr.mxu0 0.0
  %569 = vmatpush2.msra.mxu0 %v121
  %570 = vmatprep.subr.mxu0 0.0
  %571 = vmatpush2.msra.mxu0 %v120
  %572 = vmatprep.mubr.f32.mxu0 %v25
  %573 = vmatmul.mubr.f32.gmra.mxu0 %v24
  %v574 = vpop.f32.mrf.mxu0
  %v575 = vadd.f32 %v505, %v574
  %v576 = vpop.f32.mrf.mxu0
  %577 = vdwg.mxu0
  %578 = vmatprep.subr.mxu0 0.0
  %579 = vmatpush1.msra.mxu0 %v151
  %580 = vmatprep.subr.mxu0 0.0
  %581 = vmatpush1.msra.mxu0 %v150
  %582 = vmatprep.subr.mxu0 0.0
  %583 = vmatpush1.msra.mxu0 %v149
  %584 = vmatprep.subr.mxu0 0.0
  %585 = vmatpush1.msra.mxu0 %v148
  %586 = vmatprep.subr.mxu0 0.0
  %587 = vmatpush1.msra.mxu0 %v147
  %588 = vmatprep.subr.mxu0 0.0
  %589 = vmatpush1.msra.mxu0 %v146
  %590 = vmatprep.subr.mxu0 0.0
  %591 = vmatpush1.msra.mxu0 %v145
  %592 = vmatprep.subr.mxu0 0.0
  %593 = vmatpush1.msra.mxu0 %v144
  %594 = vmatprep.subr.mxu0 0.0
  %595 = vmatpush1.msra.mxu0 %v143
  %596 = vmatprep.subr.mxu0 0.0
  %597 = vmatpush1.msra.mxu0 %v142
  %598 = vmatprep.subr.mxu0 0.0
  %599 = vmatpush1.msra.mxu0 %v141
  %600 = vmatprep.subr.mxu0 0.0
  %601 = vmatpush1.msra.mxu0 %v140
  %602 = vmatprep.subr.mxu0 0.0
  %603 = vmatpush1.msra.mxu0 %v139
  %604 = vmatprep.subr.mxu0 0.0
  %605 = vmatpush1.msra.mxu0 %v138
  %606 = vmatprep.subr.mxu0 0.0
  %607 = vmatpush1.msra.mxu0 %v137
  %608 = vmatprep.subr.mxu0 0.0
  %609 = vmatpush1.msra.mxu0 %v136
  %610 = vmatprep.subr.mxu0 0.0
  %611 = vmatpush2.msra.mxu0 %v167
  %612 = vmatprep.subr.mxu0 0.0
  %613 = vmatpush2.msra.mxu0 %v166
  %614 = vmatprep.subr.mxu0 0.0
  %615 = vmatpush2.msra.mxu0 %v165
  %616 = vmatprep.subr.mxu0 0.0
  %617 = vmatpush2.msra.mxu0 %v164
  %618 = vmatprep.subr.mxu0 0.0
  %619 = vmatpush2.msra.mxu0 %v163
  %620 = vmatprep.subr.mxu0 0.0
  %621 = vmatpush2.msra.mxu0 %v162
  %622 = vmatprep.subr.mxu0 0.0
  %623 = vmatpush2.msra.mxu0 %v161
  %624 = vmatprep.subr.mxu0 0.0
  %625 = vmatpush2.msra.mxu0 %v160
  %626 = vmatprep.subr.mxu0 0.0
  %627 = vmatpush2.msra.mxu0 %v159
  %628 = vmatprep.subr.mxu0 0.0
  %629 = vmatpush2.msra.mxu0 %v158
  %630 = vmatprep.subr.mxu0 0.0
  %631 = vmatpush2.msra.mxu0 %v157
  %632 = vmatprep.subr.mxu0 0.0
  %633 = vmatpush2.msra.mxu0 %v156
  %634 = vmatprep.subr.mxu0 0.0
  %635 = vmatpush2.msra.mxu0 %v155
  %636 = vmatprep.subr.mxu0 0.0
  %637 = vmatpush2.msra.mxu0 %v154
  %638 = vmatprep.subr.mxu0 0.0
  %639 = vmatpush2.msra.mxu0 %v153
  %640 = vmatprep.subr.mxu0 0.0
  %641 = vmatpush2.msra.mxu0 %v152
  %642 = vmatprep.mubr.f32.mxu0 %v27
  %643 = vmatmul.mubr.f32.gmra.mxu0 %v26
  %v644 = vpop.f32.mrf.mxu0
  %v645 = vadd.f32 %v575, %v644
  %v646 = vpop.f32.mrf.mxu0
  %647 = vdwg.mxu0
  %648 = vmatprep.subr.mxu0 0.0
  %649 = vmatpush1.msra.mxu0 %v183
  %650 = vmatprep.subr.mxu0 0.0
  %651 = vmatpush1.msra.mxu0 %v182
  %652 = vmatprep.subr.mxu0 0.0
  %653 = vmatpush1.msra.mxu0 %v181
  %654 = vmatprep.subr.mxu0 0.0
  %655 = vmatpush1.msra.mxu0 %v180
  %656 = vmatprep.subr.mxu0 0.0
  %657 = vmatpush1.msra.mxu0 %v179
  %658 = vmatprep.subr.mxu0 0.0
  %659 = vmatpush1.msra.mxu0 %v178
  %660 = vmatprep.subr.mxu0 0.0
  %661 = vmatpush1.msra.mxu0 %v177
  %662 = vmatprep.subr.mxu0 0.0
  %663 = vmatpush1.msra.mxu0 %v176
  %664 = vmatprep.subr.mxu0 0.0
  %665 = vmatpush1.msra.mxu0 %v175
  %666 = vmatprep.subr.mxu0 0.0
  %667 = vmatpush1.msra.mxu0 %v174
  %668 = vmatprep.subr.mxu0 0.0
  %669 = vmatpush1.msra.mxu0 %v173
  %670 = vmatprep.subr.mxu0 0.0
  %671 = vmatpush1.msra.mxu0 %v172
  %672 = vmatprep.subr.mxu0 0.0
  %673 = vmatpush1.msra.mxu0 %v171
  %674 = vmatprep.subr.mxu0 0.0
  %675 = vmatpush1.msra.mxu0 %v170
  %676 = vmatprep.subr.mxu0 0.0
  %677 = vmatpush1.msra.mxu0 %v169
  %678 = vmatprep.subr.mxu0 0.0
  %679 = vmatpush1.msra.mxu0 %v168
  %680 = vmatprep.subr.mxu0 0.0
  %681 = vmatpush2.msra.mxu0 %v199
  %682 = vmatprep.subr.mxu0 0.0
  %683 = vmatpush2.msra.mxu0 %v198
  %684 = vmatprep.subr.mxu0 0.0
  %685 = vmatpush2.msra.mxu0 %v197
  %686 = vmatprep.subr.mxu0 0.0
  %687 = vmatpush2.msra.mxu0 %v196
  %688 = vmatprep.subr.mxu0 0.0
  %689 = vmatpush2.msra.mxu0 %v195
  %690 = vmatprep.subr.mxu0 0.0
  %691 = vmatpush2.msra.mxu0 %v194
  %692 = vmatprep.subr.mxu0 0.0
  %693 = vmatpush2.msra.mxu0 %v193
  %694 = vmatprep.subr.mxu0 0.0
  %695 = vmatpush2.msra.mxu0 %v192
  %696 = vmatprep.subr.mxu0 0.0
  %697 = vmatpush2.msra.mxu0 %v191
  %698 = vmatprep.subr.mxu0 0.0
  %699 = vmatpush2.msra.mxu0 %v190
  %700 = vmatprep.subr.mxu0 0.0
  %701 = vmatpush2.msra.mxu0 %v189
  %702 = vmatprep.subr.mxu0 0.0
  %703 = vmatpush2.msra.mxu0 %v188
  %704 = vmatprep.subr.mxu0 0.0
  %705 = vmatpush2.msra.mxu0 %v187
  %706 = vmatprep.subr.mxu0 0.0
  %707 = vmatpush2.msra.mxu0 %v186
  %708 = vmatprep.subr.mxu0 0.0
  %709 = vmatpush2.msra.mxu0 %v185
  %710 = vmatprep.subr.mxu0 0.0
  %711 = vmatpush2.msra.mxu0 %v184
  %712 = vmatprep.mubr.f32.mxu0 %v29
  %713 = vmatmul.mubr.f32.gmra.mxu0 %v28
  %v714 = vpop.f32.mrf.mxu0
  %v715 = vadd.f32 %v645, %v714
  %v716 = vpop.f32.mrf.mxu0
  %717 = vdwg.mxu0
  %718 = vmatprep.subr.mxu0 0.0
  %719 = vmatpush1.msra.mxu0 %v215
  %720 = vmatprep.subr.mxu0 0.0
  %721 = vmatpush1.msra.mxu0 %v214
  %722 = vmatprep.subr.mxu0 0.0
  %723 = vmatpush1.msra.mxu0 %v213
  %724 = vmatprep.subr.mxu0 0.0
  %725 = vmatpush1.msra.mxu0 %v212
  %726 = vmatprep.subr.mxu0 0.0
  %727 = vmatpush1.msra.mxu0 %v211
  %728 = vmatprep.subr.mxu0 0.0
  %729 = vmatpush1.msra.mxu0 %v210
  %730 = vmatprep.subr.mxu0 0.0
  %731 = vmatpush1.msra.mxu0 %v209
  %732 = vmatprep.subr.mxu0 0.0
  %733 = vmatpush1.msra.mxu0 %v208
  %734 = vmatprep.subr.mxu0 0.0
  %735 = vmatpush1.msra.mxu0 %v207
  %736 = vmatprep.subr.mxu0 0.0
  %737 = vmatpush1.msra.mxu0 %v206
  %738 = vmatprep.subr.mxu0 0.0
  %739 = vmatpush1.msra.mxu0 %v205
  %740 = vmatprep.subr.mxu0 0.0
  %741 = vmatpush1.msra.mxu0 %v204
  %742 = vmatprep.subr.mxu0 0.0
  %743 = vmatpush1.msra.mxu0 %v203
  %744 = vmatprep.subr.mxu0 0.0
  %745 = vmatpush1.msra.mxu0 %v202
  %746 = vmatprep.subr.mxu0 0.0
  %747 = vmatpush1.msra.mxu0 %v201
  %748 = vmatprep.subr.mxu0 0.0
  %749 = vmatpush1.msra.mxu0 %v200
  %750 = vmatprep.subr.mxu0 0.0
  %751 = vmatpush2.msra.mxu0 %v231
  %752 = vmatprep.subr.mxu0 0.0
  %753 = vmatpush2.msra.mxu0 %v230
  %754 = vmatprep.subr.mxu0 0.0
  %755 = vmatpush2.msra.mxu0 %v229
  %756 = vmatprep.subr.mxu0 0.0
  %757 = vmatpush2.msra.mxu0 %v228
  %758 = vmatprep.subr.mxu0 0.0
  %759 = vmatpush2.msra.mxu0 %v227
  %760 = vmatprep.subr.mxu0 0.0
  %761 = vmatpush2.msra.mxu0 %v226
  %762 = vmatprep.subr.mxu0 0.0
  %763 = vmatpush2.msra.mxu0 %v225
  %764 = vmatprep.subr.mxu0 0.0
  %765 = vmatpush2.msra.mxu0 %v224
  %766 = vmatprep.subr.mxu0 0.0
  %767 = vmatpush2.msra.mxu0 %v223
  %768 = vmatprep.subr.mxu0 0.0
  %769 = vmatpush2.msra.mxu0 %v222
  %770 = vmatprep.subr.mxu0 0.0
  %771 = vmatpush2.msra.mxu0 %v221
  %772 = vmatprep.subr.mxu0 0.0
  %773 = vmatpush2.msra.mxu0 %v220
  %774 = vmatprep.subr.mxu0 0.0
  %775 = vmatpush2.msra.mxu0 %v219
  %776 = vmatprep.subr.mxu0 0.0
  %777 = vmatpush2.msra.mxu0 %v218
  %778 = vmatprep.subr.mxu0 0.0
  %779 = vmatpush2.msra.mxu0 %v217
  %780 = vmatprep.subr.mxu0 0.0
  %781 = vmatpush2.msra.mxu0 %v216
  %782 = vmatprep.mubr.f32.mxu0 %v31
  %783 = vmatmul.mubr.f32.gmra.mxu0 %v30
  %v784 = vpop.f32.mrf.mxu0
  %v785 = vadd.f32 %v715, %v784
  %v786 = vpop.f32.mrf.mxu0
  %787 = vdwg.mxu0
  %788 = vmatprep.subr.mxu0 0.0
  %789 = vmatpush1.msra.mxu0 %v247
  %790 = vmatprep.subr.mxu0 0.0
  %791 = vmatpush1.msra.mxu0 %v246
  %792 = vmatprep.subr.mxu0 0.0
  %793 = vmatpush1.msra.mxu0 %v245
  %794 = vmatprep.subr.mxu0 0.0
  %795 = vmatpush1.msra.mxu0 %v244
  %796 = vmatprep.subr.mxu0 0.0
  %797 = vmatpush1.msra.mxu0 %v243
  %798 = vmatprep.subr.mxu0 0.0
  %799 = vmatpush1.msra.mxu0 %v242
  %800 = vmatprep.subr.mxu0 0.0
  %801 = vmatpush1.msra.mxu0 %v241
  %802 = vmatprep.subr.mxu0 0.0
  %803 = vmatpush1.msra.mxu0 %v240
  %804 = vmatprep.subr.mxu0 0.0
  %805 = vmatpush1.msra.mxu0 %v239
  %806 = vmatprep.subr.mxu0 0.0
  %807 = vmatpush1.msra.mxu0 %v238
  %808 = vmatprep.subr.mxu0 0.0
  %809 = vmatpush1.msra.mxu0 %v237
  %810 = vmatprep.subr.mxu0 0.0
  %811 = vmatpush1.msra.mxu0 %v236
  %812 = vmatprep.subr.mxu0 0.0
  %813 = vmatpush1.msra.mxu0 %v235
  %814 = vmatprep.subr.mxu0 0.0
  %815 = vmatpush1.msra.mxu0 %v234
  %816 = vmatprep.subr.mxu0 0.0
  %817 = vmatpush1.msra.mxu0 %v233
  %818 = vmatprep.subr.mxu0 0.0
  %819 = vmatpush1.msra.mxu0 %v232
  %820 = vmatprep.subr.mxu0 0.0
  %821 = vmatpush2.msra.mxu0 %v263
  %822 = vmatprep.subr.mxu0 0.0
  %823 = vmatpush2.msra.mxu0 %v262
  %824 = vmatprep.subr.mxu0 0.0
  %825 = vmatpush2.msra.mxu0 %v261
  %826 = vmatprep.subr.mxu0 0.0
  %827 = vmatpush2.msra.mxu0 %v260
  %828 = vmatprep.subr.mxu0 0.0
  %829 = vmatpush2.msra.mxu0 %v259
  %830 = vmatprep.subr.mxu0 0.0
  %831 = vmatpush2.msra.mxu0 %v258
  %832 = vmatprep.subr.mxu0 0.0
  %833 = vmatpush2.msra.mxu0 %v257
  %834 = vmatprep.subr.mxu0 0.0
  %835 = vmatpush2.msra.mxu0 %v256
  %836 = vmatprep.subr.mxu0 0.0
  %837 = vmatpush2.msra.mxu0 %v255
  %838 = vmatprep.subr.mxu0 0.0
  %839 = vmatpush2.msra.mxu0 %v254
  %840 = vmatprep.subr.mxu0 0.0
  %841 = vmatpush2.msra.mxu0 %v253
  %842 = vmatprep.subr.mxu0 0.0
  %843 = vmatpush2.msra.mxu0 %v252
  %844 = vmatprep.subr.mxu0 0.0
  %845 = vmatpush2.msra.mxu0 %v251
  %846 = vmatprep.subr.mxu0 0.0
  %847 = vmatpush2.msra.mxu0 %v250
  %848 = vmatprep.subr.mxu0 0.0
  %849 = vmatpush2.msra.mxu0 %v249
  %850 = vmatprep.subr.mxu0 0.0
  %851 = vmatpush2.msra.mxu0 %v248
  %852 = vmatprep.mubr.f32.mxu0 %v33
  %853 = vmatmul.mubr.f32.gmra.mxu0 %v32
  %v854 = vpop.f32.mrf.mxu0
  %v855 = vadd.f32 %v785, %v854
  %v856 = vpop.f32.mrf.mxu0
  %857 = vdwg.mxu0
  %858 = vmatprep.subr.mxu0 0.0
  %859 = vmatpush1.msra.mxu0 %v279
  %860 = vmatprep.subr.mxu0 0.0
  %861 = vmatpush1.msra.mxu0 %v278
  %862 = vmatprep.subr.mxu0 0.0
  %863 = vmatpush1.msra.mxu0 %v277
  %864 = vmatprep.subr.mxu0 0.0
  %865 = vmatpush1.msra.mxu0 %v276
  %866 = vmatprep.subr.mxu0 0.0
  %867 = vmatpush1.msra.mxu0 %v275
  %868 = vmatprep.subr.mxu0 0.0
  %869 = vmatpush1.msra.mxu0 %v274
  %870 = vmatprep.subr.mxu0 0.0
  %871 = vmatpush1.msra.mxu0 %v273
  %872 = vmatprep.subr.mxu0 0.0
  %873 = vmatpush1.msra.mxu0 %v272
  %874 = vmatprep.subr.mxu0 0.0
  %875 = vmatpush1.msra.mxu0 %v271
  %876 = vmatprep.subr.mxu0 0.0
  %877 = vmatpush1.msra.mxu0 %v270
  %878 = vmatprep.subr.mxu0 0.0
  %879 = vmatpush1.msra.mxu0 %v269
  %880 = vmatprep.subr.mxu0 0.0
  %881 = vmatpush1.msra.mxu0 %v268
  %882 = vmatprep.subr.mxu0 0.0
  %883 = vmatpush1.msra.mxu0 %v267
  %884 = vmatprep.subr.mxu0 0.0
  %885 = vmatpush1.msra.mxu0 %v266
  %886 = vmatprep.subr.mxu0 0.0
  %887 = vmatpush1.msra.mxu0 %v265
  %888 = vmatprep.subr.mxu0 0.0
  %889 = vmatpush1.msra.mxu0 %v264
  %890 = vmatprep.subr.mxu0 0.0
  %891 = vmatpush2.msra.mxu0 %v295
  %892 = vmatprep.subr.mxu0 0.0
  %893 = vmatpush2.msra.mxu0 %v294
  %894 = vmatprep.subr.mxu0 0.0
  %895 = vmatpush2.msra.mxu0 %v293
  %896 = vmatprep.subr.mxu0 0.0
  %897 = vmatpush2.msra.mxu0 %v292
  %898 = vmatprep.subr.mxu0 0.0
  %899 = vmatpush2.msra.mxu0 %v291
  %900 = vmatprep.subr.mxu0 0.0
  %901 = vmatpush2.msra.mxu0 %v290
  %902 = vmatprep.subr.mxu0 0.0
  %903 = vmatpush2.msra.mxu0 %v289
  %904 = vmatprep.subr.mxu0 0.0
  %905 = vmatpush2.msra.mxu0 %v288
  %906 = vmatprep.subr.mxu0 0.0
  %907 = vmatpush2.msra.mxu0 %v287
  %908 = vmatprep.subr.mxu0 0.0
  %909 = vmatpush2.msra.mxu0 %v286
  %910 = vmatprep.subr.mxu0 0.0
  %911 = vmatpush2.msra.mxu0 %v285
  %912 = vmatprep.subr.mxu0 0.0
  %913 = vmatpush2.msra.mxu0 %v284
  %914 = vmatprep.subr.mxu0 0.0
  %915 = vmatpush2.msra.mxu0 %v283
  %916 = vmatprep.subr.mxu0 0.0
  %917 = vmatpush2.msra.mxu0 %v282
  %918 = vmatprep.subr.mxu0 0.0
  %919 = vmatpush2.msra.mxu0 %v281
  %920 = vmatprep.subr.mxu0 0.0
  %921 = vmatpush2.msra.mxu0 %v280
  %922 = vmatprep.mubr.f32.mxu0 %v35
  %923 = vmatmul.mubr.f32.gmra.mxu0 %v34
  %v924 = vpop.f32.mrf.mxu0
  %v925 = vadd.f32 %v855, %v924
  %v926 = vpop.f32.mrf.mxu0
  %927 = vdwg.mxu0
  %928 = vmatprep.subr.mxu0 0.0
  %929 = vmatpush1.msra.mxu0 %v311
  %930 = vmatprep.subr.mxu0 0.0
  %931 = vmatpush1.msra.mxu0 %v310
  %932 = vmatprep.subr.mxu0 0.0
  %933 = vmatpush1.msra.mxu0 %v309
  %934 = vmatprep.subr.mxu0 0.0
  %935 = vmatpush1.msra.mxu0 %v308
  %936 = vmatprep.subr.mxu0 0.0
  %937 = vmatpush1.msra.mxu0 %v307
  %938 = vmatprep.subr.mxu0 0.0
  %939 = vmatpush1.msra.mxu0 %v306
  %940 = vmatprep.subr.mxu0 0.0
  %941 = vmatpush1.msra.mxu0 %v305
  %942 = vmatprep.subr.mxu0 0.0
  %943 = vmatpush1.msra.mxu0 %v304
  %944 = vmatprep.subr.mxu0 0.0
  %945 = vmatpush1.msra.mxu0 %v303
  %946 = vmatprep.subr.mxu0 0.0
  %947 = vmatpush1.msra.mxu0 %v302
  %948 = vmatprep.subr.mxu0 0.0
  %949 = vmatpush1.msra.mxu0 %v301
  %950 = vmatprep.subr.mxu0 0.0
  %951 = vmatpush1.msra.mxu0 %v300
  %952 = vmatprep.subr.mxu0 0.0
  %953 = vmatpush1.msra.mxu0 %v299
  %954 = vmatprep.subr.mxu0 0.0
  %955 = vmatpush1.msra.mxu0 %v298
  %956 = vmatprep.subr.mxu0 0.0
  %957 = vmatpush1.msra.mxu0 %v297
  %958 = vmatprep.subr.mxu0 0.0
  %959 = vmatpush1.msra.mxu0 %v296
  %960 = vmatprep.subr.mxu0 0.0
  %961 = vmatpush2.msra.mxu0 %v327
  %962 = vmatprep.subr.mxu0 0.0
  %963 = vmatpush2.msra.mxu0 %v326
  %964 = vmatprep.subr.mxu0 0.0
  %965 = vmatpush2.msra.mxu0 %v325
  %966 = vmatprep.subr.mxu0 0.0
  %967 = vmatpush2.msra.mxu0 %v324
  %968 = vmatprep.subr.mxu0 0.0
  %969 = vmatpush2.msra.mxu0 %v323
  %970 = vmatprep.subr.mxu0 0.0
  %971 = vmatpush2.msra.mxu0 %v322
  %972 = vmatprep.subr.mxu0 0.0
  %973 = vmatpush2.msra.mxu0 %v321
  %974 = vmatprep.subr.mxu0 0.0
  %975 = vmatpush2.msra.mxu0 %v320
  %976 = vmatprep.subr.mxu0 0.0
  %977 = vmatpush2.msra.mxu0 %v319
  %978 = vmatprep.subr.mxu0 0.0
  %979 = vmatpush2.msra.mxu0 %v318
  %980 = vmatprep.subr.mxu0 0.0
  %981 = vmatpush2.msra.mxu0 %v317
  %982 = vmatprep.subr.mxu0 0.0
  %983 = vmatpush2.msra.mxu0 %v316
  %984 = vmatprep.subr.mxu0 0.0
  %985 = vmatpush2.msra.mxu0 %v315
  %986 = vmatprep.subr.mxu0 0.0
  %987 = vmatpush2.msra.mxu0 %v314
  %988 = vmatprep.subr.mxu0 0.0
  %989 = vmatpush2.msra.mxu0 %v313
  %990 = vmatprep.subr.mxu0 0.0
  %991 = vmatpush2.msra.mxu0 %v312
  %992 = vmatprep.mubr.f32.mxu0 %v37
  %993 = vmatmul.mubr.f32.gmra.mxu0 %v36
  %v994 = vpop.f32.mrf.mxu0
  %v995 = vadd.f32 %v925, %v994
  %v996 = vpop.f32.mrf.mxu0
  %997 = vdwg.mxu0
  %998 = vmatprep.subr.mxu0 0.0
  %999 = vmatpush1.msra.mxu0 %v343
  %1000 = vmatprep.subr.mxu0 0.0
  %1001 = vmatpush1.msra.mxu0 %v342
  %1002 = vmatprep.subr.mxu0 0.0
  %1003 = vmatpush1.msra.mxu0 %v341
  %1004 = vmatprep.subr.mxu0 0.0
  %1005 = vmatpush1.msra.mxu0 %v340
  %1006 = vmatprep.subr.mxu0 0.0
  %1007 = vmatpush1.msra.mxu0 %v339
  %1008 = vmatprep.subr.mxu0 0.0
  %1009 = vmatpush1.msra.mxu0 %v338
  %1010 = vmatprep.subr.mxu0 0.0
  %1011 = vmatpush1.msra.mxu0 %v337
  %1012 = vmatprep.subr.mxu0 0.0
  %1013 = vmatpush1.msra.mxu0 %v336
  %1014 = vmatprep.subr.mxu0 0.0
  %1015 = vmatpush1.msra.mxu0 %v335
  %1016 = vmatprep.subr.mxu0 0.0
  %1017 = vmatpush1.msra.mxu0 %v334
  %1018 = vmatprep.subr.mxu0 0.0
  %1019 = vmatpush1.msra.mxu0 %v333
  %1020 = vmatprep.subr.mxu0 0.0
  %1021 = vmatpush1.msra.mxu0 %v332
  %1022 = vmatprep.subr.mxu0 0.0
  %1023 = vmatpush1.msra.mxu0 %v331
  %1024 = vmatprep.subr.mxu0 0.0
  %1025 = vmatpush1.msra.mxu0 %v330
  %1026 = vmatprep.subr.mxu0 0.0
  %1027 = vmatpush1.msra.mxu0 %v329
  %1028 = vmatprep.subr.mxu0 0.0
  %1029 = vmatpush1.msra.mxu0 %v328
  %1030 = vmatprep.subr.mxu0 0.0
  %1031 = vmatpush2.msra.mxu0 0.0
  %1032 = vmatprep.subr.mxu0 0.0
  %1033 = vmatpush2.msra.mxu0 0.0
  %1034 = vmatprep.subr.mxu0 0.0
  %1035 = vmatpush2.msra.mxu0 0.0
  %1036 = vmatprep.subr.mxu0 0.0
  %1037 = vmatpush2.msra.mxu0 0.0
  %1038 = vmatprep.subr.mxu0 0.0
  %1039 = vmatpush2.msra.mxu0 0.0
  %1040 = vmatprep.subr.mxu0 0.0
  %1041 = vmatpush2.msra.mxu0 0.0
  %1042 = vmatprep.subr.mxu0 0.0
  %1043 = vmatpush2.msra.mxu0 0.0
  %1044 = vmatprep.subr.mxu0 0.0
  %1045 = vmatpush2.msra.mxu0 %v366
  %1046 = vmatprep.subr.mxu0 0.0
  %1047 = vmatpush2.msra.mxu0 %v351
  %1048 = vmatprep.subr.mxu0 0.0
  %1049 = vmatpush2.msra.mxu0 %v350
  %1050 = vmatprep.subr.mxu0 0.0
  %1051 = vmatpush2.msra.mxu0 %v349
  %1052 = vmatprep.subr.mxu0 0.0
  %1053 = vmatpush2.msra.mxu0 %v348
  %1054 = vmatprep.subr.mxu0 0.0
  %1055 = vmatpush2.msra.mxu0 %v347
  %1056 = vmatprep.subr.mxu0 0.0
  %1057 = vmatpush2.msra.mxu0 %v346
  %1058 = vmatprep.subr.mxu0 0.0
  %1059 = vmatpush2.msra.mxu0 %v345
  %1060 = vmatprep.subr.mxu0 0.0
  %1061 = vmatpush2.msra.mxu0 %v344
  %1062 = vmatprep.mubr.f32.mxu0 %v362
  %1063 = vmatmul.mubr.f32.gmra.mxu0 %v38
  %v1064 = vpop.f32.mrf.mxu0
  %v1065 = vadd.f32 %v995, %v1064
  %v1066 = vpop.f32.mrf.mxu0
  %1067 = vdwg.mxu0
  %v1068 = vld [vmem:[%s3] sm:$0xff]
  %v1069 = vld [vmem:[%s3 + $0x8] sm:$0xff]
  %v1070 = vld [vmem:[%s3 + $0x10] sm:$0xff]
  %v1071 = vld [vmem:[%s3 + $0x18] sm:$0xff]
  %v1072 = vld [vmem:[%s3 + $0x20] sm:$0xff]
  %v1073 = vld [vmem:[%s3 + $0x28] sm:$0xff]
  %v1074 = vld [vmem:[%s3 + $0x30] sm:$0xff]
  %v1075 = vld [vmem:[%s3 + $0x38] sm:$0xff]
  %v1076 = vld [vmem:[%s3 + $0x40] sm:$0xff]
  %v1077 = vld [vmem:[%s3 + $0x48] sm:$0xff]
  %v1078 = vld [vmem:[%s3 + $0x50] sm:$0xff]
  %v1079 = vld [vmem:[%s3 + $0x58] sm:$0xff]
  %v1080 = vld [vmem:[%s3 + $0x60] sm:$0xff]
  %v1081 = vld [vmem:[%s3 + $0x68] sm:$0xff]
  %v1082 = vld [vmem:[%s3 + $0x70] sm:$0xff]
  %v1083 = vld [vmem:[%s3 + $0x78] sm:$0xff]
  %v1084 = vld [vmem:[%s3 + $0x80] sm:$0xff]
  %v1085 = vld [vmem:[%s3 + $0x88] sm:$0xff]
  %v1086 = vld [vmem:[%s3 + $0x90] sm:$0xff]
  %v1087 = vld [vmem:[%s3 + $0x98] sm:$0xff]
  %v1088 = vld [vmem:[%s3 + $0xa0] sm:$0xff]
  %v1089 = vld [vmem:[%s3 + $0xa8] sm:$0xff]
  %v1090 = vld [vmem:[%s3 + $0xb0] sm:$0xff]
  %v1091 = vld [vmem:[%s3 + $0xb8] sm:$0xff]
  %v1092 = vld [vmem:[%s3 + $0xc0] sm:$0xff]
  %v1093 = vld [vmem:[%s3 + $0xc8] sm:$0xff]
  %v1094 = vld [vmem:[%s3 + $0xd0] sm:$0xff]
  %v1095 = vld [vmem:[%s3 + $0xd8] sm:$0xff]
  %v1096 = vld [vmem:[%s3 + $0xe0] sm:$0xff]
  %v1097 = vld [vmem:[%s3 + $0xe8] sm:$0xff]
  %v1098 = vld [vmem:[%s3 + $0xf0] sm:$0xff]
  %v1099 = vld [vmem:[%s3 + $0xf8] sm:$0xff]
  %v1100 = vld [vmem:[%s3 + $0x100] sm:$0xff]
  %v1101 = vld [vmem:[%s3 + $0x108] sm:$0xff]
  %v1102 = vld [vmem:[%s3 + $0x110] sm:$0xff]
  %v1103 = vld [vmem:[%s3 + $0x118] sm:$0xff]
  %v1104 = vld [vmem:[%s3 + $0x120] sm:$0xff]
  %v1105 = vld [vmem:[%s3 + $0x128] sm:$0xff]
  %v1106 = vld [vmem:[%s3 + $0x130] sm:$0xff]
  %v1107 = vld [vmem:[%s3 + $0x138] sm:$0xff]
  %v1108 = vld [vmem:[%s3 + $0x140] sm:$0xff]
  %v1109 = vld [vmem:[%s3 + $0x148] sm:$0xff]
  %v1110 = vld [vmem:[%s3 + $0x150] sm:$0xff]
  %v1111 = vld [vmem:[%s3 + $0x158] sm:$0xff]
  %v1112 = vld [vmem:[%s3 + $0x160] sm:$0xff]
  %v1113 = vld [vmem:[%s3 + $0x168] sm:$0xff]
  %v1114 = vld [vmem:[%s3 + $0x170] sm:$0xff]
  %v1115 = vld [vmem:[%s3 + $0x178] sm:$0xff]
  %v1116 = vld [vmem:[%s3 + $0x180] sm:$0xff]
  %v1117 = vld [vmem:[%s3 + $0x188] sm:$0xff]
  %v1118 = vld [vmem:[%s3 + $0x190] sm:$0xff]
  %v1119 = vld [vmem:[%s3 + $0x198] sm:$0xff]
  %v1120 = vld [vmem:[%s3 + $0x1a0] sm:$0xff]
  %v1121 = vld [vmem:[%s3 + $0x1a8] sm:$0xff]
  %v1122 = vld [vmem:[%s3 + $0x1b0] sm:$0xff]
  %v1123 = vld [vmem:[%s3 + $0x1b8] sm:$0xff]
  %v1124 = vld [vmem:[%s3 + $0x1c0] sm:$0xff]
  %v1125 = vld [vmem:[%s3 + $0x1c8] sm:$0xff]
  %v1126 = vld [vmem:[%s3 + $0x1d0] sm:$0xff]
  %v1127 = vld [vmem:[%s3 + $0x1d8] sm:$0xff]
  %v1128 = vld [vmem:[%s3 + $0x1e0] sm:$0xff]
  %v1129 = vld [vmem:[%s3 + $0x1e8] sm:$0xff]
  %v1130 = vld [vmem:[%s3 + $0x1f0] sm:$0xff]
  %v1131 = vld [vmem:[%s3 + $0x1f8] sm:$0xff]
  %v1132 = vld [vmem:[%s3 + $0x200] sm:$0xff]
  %v1133 = vld [vmem:[%s3 + $0x208] sm:$0xff]
  %v1134 = vld [vmem:[%s3 + $0x210] sm:$0xff]
  %v1135 = vld [vmem:[%s3 + $0x218] sm:$0xff]
  %v1136 = vld [vmem:[%s3 + $0x220] sm:$0xff]
  %v1137 = vld [vmem:[%s3 + $0x228] sm:$0xff]
  %v1138 = vld [vmem:[%s3 + $0x230] sm:$0xff]
  %v1139 = vld [vmem:[%s3 + $0x238] sm:$0xff]
  %v1140 = vld [vmem:[%s3 + $0x240] sm:$0xff]
  %v1141 = vld [vmem:[%s3 + $0x248] sm:$0xff]
  %v1142 = vld [vmem:[%s3 + $0x250] sm:$0xff]
  %v1143 = vld [vmem:[%s3 + $0x258] sm:$0xff]
  %v1144 = vld [vmem:[%s3 + $0x260] sm:$0xff]
  %v1145 = vld [vmem:[%s3 + $0x268] sm:$0xff]
  %v1146 = vld [vmem:[%s3 + $0x270] sm:$0xff]
  %v1147 = vld [vmem:[%s3 + $0x278] sm:$0xff]
  %v1148 = vld [vmem:[%s3 + $0x280] sm:$0xff]
  %v1149 = vld [vmem:[%s3 + $0x288] sm:$0xff]
  %v1150 = vld [vmem:[%s3 + $0x290] sm:$0xff]
  %v1151 = vld [vmem:[%s3 + $0x298] sm:$0xff]
  %v1152 = vld [vmem:[%s3 + $0x2a0] sm:$0xff]
  %v1153 = vld [vmem:[%s3 + $0x2a8] sm:$0xff]
  %v1154 = vld [vmem:[%s3 + $0x2b0] sm:$0xff]
  %v1155 = vld [vmem:[%s3 + $0x2b8] sm:$0xff]
  %v1156 = vld [vmem:[%s3 + $0x2c0] sm:$0xff]
  %v1157 = vld [vmem:[%s3 + $0x2c8] sm:$0xff]
  %v1158 = vld [vmem:[%s3 + $0x2d0] sm:$0xff]
  %v1159 = vld [vmem:[%s3 + $0x2d8] sm:$0xff]
  %v1160 = vld [vmem:[%s3 + $0x2e0] sm:$0xff]
  %v1161 = vld [vmem:[%s3 + $0x2e8] sm:$0xff]
  %v1162 = vld [vmem:[%s3 + $0x2f0] sm:$0xff]
  %v1163 = vld [vmem:[%s3 + $0x2f8] sm:$0xff]
  %v1164 = vld [vmem:[%s3 + $0x300] sm:$0xff]
  %v1165 = vld [vmem:[%s3 + $0x308] sm:$0xff]
  %v1166 = vld [vmem:[%s3 + $0x310] sm:$0xff]
  %v1167 = vld [vmem:[%s3 + $0x318] sm:$0xff]
  %v1168 = vld [vmem:[%s3 + $0x320] sm:$0xff]
  %v1169 = vld [vmem:[%s3 + $0x328] sm:$0xff]
  %v1170 = vld [vmem:[%s3 + $0x330] sm:$0xff]
  %v1171 = vld [vmem:[%s3 + $0x338] sm:$0xff]
  %v1172 = vld [vmem:[%s3 + $0x340] sm:$0xff]
  %v1173 = vld [vmem:[%s3 + $0x348] sm:$0xff]
  %v1174 = vld [vmem:[%s3 + $0x350] sm:$0xff]
  %v1175 = vld [vmem:[%s3 + $0x358] sm:$0xff]
  %v1176 = vld [vmem:[%s3 + $0x360] sm:$0xff]
  %v1177 = vld [vmem:[%s3 + $0x368] sm:$0xff]
  %v1178 = vld [vmem:[%s3 + $0x370] sm:$0xff]
  %v1179 = vld [vmem:[%s3 + $0x378] sm:$0xff]
  %v1180 = vld [vmem:[%s3 + $0x380] sm:$0xff]
  %v1181 = vld [vmem:[%s3 + $0x388] sm:$0xff]
  %v1182 = vld [vmem:[%s3 + $0x390] sm:$0xff]
  %v1183 = vld [vmem:[%s3 + $0x398] sm:$0xff]
  %v1184 = vld [vmem:[%s3 + $0x3a0] sm:$0xff]
  %v1185 = vld [vmem:[%s3 + $0x3a8] sm:$0xff]
  %v1186 = vld [vmem:[%s3 + $0x3b0] sm:$0xff]
  %v1187 = vld [vmem:[%s3 + $0x3b8] sm:$0xff]
  %v1188 = vld [vmem:[%s3 + $0x3c0] sm:$0xff]
  %v1189 = vld [vmem:[%s3 + $0x3c8] sm:$0xff]
  %v1190 = vld [vmem:[%s3 + $0x3d0] sm:$0xff]
  %v1191 = vld [vmem:[%s3 + $0x3d8] sm:$0xff]
  %v1192 = vld [vmem:[%s3 + $0x3e0] sm:$0xff]
  %v1193 = vld [vmem:[%s3 + $0x3e8] sm:$0xff]
  %v1194 = vld [vmem:[%s3 + $0x3f0] sm:$0xff]
  %v1195 = vld [vmem:[%s3 + $0x3f8] sm:$0xff]
  %v1196 = vld [vmem:[%s3 + $0x400] sm:$0xff]
  %v1197 = vld [vmem:[%s3 + $0x408] sm:$0xff]
  %v1198 = vld [vmem:[%s3 + $0x410] sm:$0xff]
  %v1199 = vld [vmem:[%s3 + $0x418] sm:$0xff]
  %v1200 = vld [vmem:[%s3 + $0x420] sm:$0xff]
  %v1201 = vld [vmem:[%s3 + $0x428] sm:$0xff]
  %v1202 = vld [vmem:[%s3 + $0x430] sm:$0xff]
  %v1203 = vld [vmem:[%s3 + $0x438] sm:$0xff]
  %v1204 = vld [vmem:[%s3 + $0x440] sm:$0xff]
  %v1205 = vld [vmem:[%s3 + $0x448] sm:$0xff]
  %v1206 = vld [vmem:[%s3 + $0x450] sm:$0xff]
  %v1207 = vld [vmem:[%s3 + $0x458] sm:$0xff]
  %v1208 = vld [vmem:[%s3 + $0x460] sm:$0xff]
  %v1209 = vld [vmem:[%s3 + $0x468] sm:$0xff]
  %v1210 = vld [vmem:[%s3 + $0x470] sm:$0xff]
  %v1211 = vld [vmem:[%s3 + $0x478] sm:$0xff]
  %v1212 = vld [vmem:[%s3 + $0x480] sm:$0xff]
  %v1213 = vld [vmem:[%s3 + $0x488] sm:$0xff]
  %v1214 = vld [vmem:[%s3 + $0x490] sm:$0xff]
  %v1215 = vld [vmem:[%s3 + $0x498] sm:$0xff]
  %v1216 = vld [vmem:[%s3 + $0x4a0] sm:$0xff]
  %v1217 = vld [vmem:[%s3 + $0x4a8] sm:$0xff]
  %v1218 = vld [vmem:[%s3 + $0x4b0] sm:$0xff]
  %v1219 = vld [vmem:[%s3 + $0x4b8] sm:$0xff]
  %v1220 = vld [vmem:[%s3 + $0x4c0] sm:$0xff]
  %v1221 = vld [vmem:[%s3 + $0x4c8] sm:$0xff]
  %v1222 = vld [vmem:[%s3 + $0x4d0] sm:$0xff]
  %v1223 = vld [vmem:[%s3 + $0x4d8] sm:$0xff]
  %v1224 = vld [vmem:[%s3 + $0x4e0] sm:$0xff]
  %v1225 = vld [vmem:[%s3 + $0x4e8] sm:$0xff]
  %v1226 = vld [vmem:[%s3 + $0x4f0] sm:$0xff]
  %v1227 = vld [vmem:[%s3 + $0x4f8] sm:$0xff]
  %v1228 = vld [vmem:[%s3 + $0x500] sm:$0xff]
  %v1229 = vld [vmem:[%s3 + $0x508] sm:$0xff]
  %v1230 = vld [vmem:[%s3 + $0x510] sm:$0xff]
  %v1231 = vld [vmem:[%s3 + $0x518] sm:$0xff]
  %v1232 = vld [vmem:[%s3 + $0x520] sm:$0xff]
  %v1233 = vld [vmem:[%s3 + $0x528] sm:$0xff]
  %v1234 = vld [vmem:[%s3 + $0x530] sm:$0xff]
  %v1235 = vld [vmem:[%s3 + $0x538] sm:$0xff]
  %v1236 = vld [vmem:[%s3 + $0x540] sm:$0xff]
  %v1237 = vld [vmem:[%s3 + $0x548] sm:$0xff]
  %v1238 = vld [vmem:[%s3 + $0x550] sm:$0xff]
  %v1239 = vld [vmem:[%s3 + $0x558] sm:$0xff]
  %v1240 = vld [vmem:[%s3 + $0x560] sm:$0xff]
  %v1241 = vld [vmem:[%s3 + $0x568] sm:$0xff]
  %v1242 = vld [vmem:[%s3 + $0x570] sm:$0xff]
  %v1243 = vld [vmem:[%s3 + $0x578] sm:$0xff]
  %v1244 = vld [vmem:[%s3 + $0x580] sm:$0xff]
  %v1245 = vld [vmem:[%s3 + $0x588] sm:$0xff]
  %v1246 = vld [vmem:[%s3 + $0x590] sm:$0xff]
  %v1247 = vld [vmem:[%s3 + $0x598] sm:$0xff]
  %v1248 = vld [vmem:[%s3 + $0x5a0] sm:$0xff]
  %v1249 = vld [vmem:[%s3 + $0x5a8] sm:$0xff]
  %v1250 = vld [vmem:[%s3 + $0x5b0] sm:$0xff]
  %v1251 = vld [vmem:[%s3 + $0x5b8] sm:$0xff]
  %v1252 = vld [vmem:[%s3 + $0x5c0] sm:$0xff]
  %v1253 = vld [vmem:[%s3 + $0x5c8] sm:$0xff]
  %v1254 = vld [vmem:[%s3 + $0x5d0] sm:$0xff]
  %v1255 = vld [vmem:[%s3 + $0x5d8] sm:$0xff]
  %v1256 = vld [vmem:[%s3 + $0x5e0] sm:$0xff]
  %v1257 = vld [vmem:[%s3 + $0x5e8] sm:$0xff]
  %v1258 = vld [vmem:[%s3 + $0x5f0] sm:$0xff]
  %v1259 = vld [vmem:[%s3 + $0x5f8] sm:$0xff]
  %v1260 = vld [vmem:[%s3 + $0x600] sm:$0xff]
  %v1261 = vld [vmem:[%s3 + $0x608] sm:$0xff]
  %v1262 = vld [vmem:[%s3 + $0x610] sm:$0xff]
  %v1263 = vld [vmem:[%s3 + $0x618] sm:$0xff]
  %v1264 = vld [vmem:[%s3 + $0x620] sm:$0xff]
  %v1265 = vld [vmem:[%s3 + $0x628] sm:$0xff]
  %v1266 = vld [vmem:[%s3 + $0x630] sm:$0xff]
  %v1267 = vld [vmem:[%s3 + $0x638] sm:$0xff]
  %v1268 = vld [vmem:[%s3 + $0x640] sm:$0xff]
  %v1269 = vld [vmem:[%s3 + $0x648] sm:$0xff]
  %v1270 = vld [vmem:[%s3 + $0x650] sm:$0xff]
  %v1271 = vld [vmem:[%s3 + $0x658] sm:$0xff]
  %v1272 = vld [vmem:[%s3 + $0x660] sm:$0xff]
  %v1273 = vld [vmem:[%s3 + $0x668] sm:$0xff]
  %v1274 = vld [vmem:[%s3 + $0x670] sm:$0xff]
  %v1275 = vld [vmem:[%s3 + $0x678] sm:$0xff]
  %v1276 = vld [vmem:[%s3 + $0x680] sm:$0xff]
  %v1277 = vld [vmem:[%s3 + $0x688] sm:$0xff]
  %v1278 = vld [vmem:[%s3 + $0x690] sm:$0xff]
  %v1279 = vld [vmem:[%s3 + $0x698] sm:$0xff]
  %v1280 = vld [vmem:[%s3 + $0x6a0] sm:$0xff]
  %v1281 = vld [vmem:[%s3 + $0x6a8] sm:$0xff]
  %v1282 = vld [vmem:[%s3 + $0x6b0] sm:$0xff]
  %v1283 = vld [vmem:[%s3 + $0x6b8] sm:$0xff]
  %v1284 = vld [vmem:[%s3 + $0x6c0] sm:$0xff]
  %v1285 = vld [vmem:[%s3 + $0x6c8] sm:$0xff]
  %v1286 = vld [vmem:[%s3 + $0x6d0] sm:$0xff]
  %v1287 = vld [vmem:[%s3 + $0x6d8] sm:$0xff]
  %v1288 = vld [vmem:[%s3 + $0x6e0] sm:$0xff]
  %v1289 = vld [vmem:[%s3 + $0x6e8] sm:$0xff]
  %v1290 = vld [vmem:[%s3 + $0x6f0] sm:$0xff]
  %v1291 = vld [vmem:[%s3 + $0x6f8] sm:$0xff]
  %v1292 = vld [vmem:[%s3 + $0x700] sm:$0xff]
  %v1293 = vld [vmem:[%s3 + $0x708] sm:$0xff]
  %v1294 = vld [vmem:[%s3 + $0x710] sm:$0xff]
  %v1295 = vld [vmem:[%s3 + $0x718] sm:$0xff]
  %v1296 = vld [vmem:[%s3 + $0x720] sm:$0xff]
  %v1297 = vld [vmem:[%s3 + $0x728] sm:$0xff]
  %v1298 = vld [vmem:[%s3 + $0x730] sm:$0xff]
  %v1299 = vld [vmem:[%s3 + $0x738] sm:$0xff]
  %v1300 = vld [vmem:[%s3 + $0x740] sm:$0xff]
  %v1301 = vld [vmem:[%s3 + $0x748] sm:$0xff]
  %v1302 = vld [vmem:[%s3 + $0x750] sm:$0xff]
  %v1303 = vld [vmem:[%s3 + $0x758] sm:$0xff]
  %v1304 = vld [vmem:[%s3 + $0x760] sm:$0xff]
  %v1305 = vld [vmem:[%s3 + $0x768] sm:$0xff]
  %v1306 = vld [vmem:[%s3 + $0x770] sm:$0xff]
  %v1307 = vld [vmem:[%s3 + $0x778] sm:$0xff]
  %v1308 = vld [vmem:[%s3 + $0x780] sm:$0xff]
  %v1309 = vld [vmem:[%s3 + $0x788] sm:$0xff]
  %v1310 = vld [vmem:[%s3 + $0x790] sm:$0xff]
  %v1311 = vld [vmem:[%s3 + $0x798] sm:$0xff]
  %v1312 = vld [vmem:[%s3 + $0x7a0] sm:$0xff]
  %v1313 = vld [vmem:[%s3 + $0x7a8] sm:$0xff]
  %v1314 = vld [vmem:[%s3 + $0x7b0] sm:$0xff]
  %v1315 = vld [vmem:[%s3 + $0x7b8] sm:$0xff]
  %v1316 = vld [vmem:[%s3 + $0x7c0] sm:$0xff]
  %v1317 = vld [vmem:[%s3 + $0x7c8] sm:$0xff]
  %v1318 = vld [vmem:[%s3 + $0x7d0] sm:$0xff]
  %v1319 = vld [vmem:[%s3 + $0x7d8] sm:$0xff]
  %v1320 = vld [vmem:[%s3 + $0x7e0] sm:$0xff]
  %v1321 = vld [vmem:[%s3 + $0x7e8] sm:$0xff]
  %v1322 = vld [vmem:[%s3 + $0x7f0] sm:$0xff]
  %v1323 = vld [vmem:[%s3 + $0x7f8] sm:$0xff]
  %v1324 = vld [vmem:[%s3 + $0x800] sm:$0xff]
  %v1325 = vld [vmem:[%s3 + $0x808] sm:$0xff]
  %v1326 = vld [vmem:[%s3 + $0x810] sm:$0xff]
  %v1327 = vld [vmem:[%s3 + $0x818] sm:$0xff]
  %v1328 = vld [vmem:[%s3 + $0x820] sm:$0xff]
  %v1329 = vld [vmem:[%s3 + $0x828] sm:$0xff]
  %v1330 = vld [vmem:[%s3 + $0x830] sm:$0xff]
  %v1331 = vld [vmem:[%s3 + $0x838] sm:$0xff]
  %v1332 = vld [vmem:[%s3 + $0x840] sm:$0xff]
  %v1333 = vld [vmem:[%s3 + $0x848] sm:$0xff]
  %v1334 = vld [vmem:[%s3 + $0x850] sm:$0xff]
  %v1335 = vld [vmem:[%s3 + $0x858] sm:$0xff]
  %v1336 = vld [vmem:[%s3 + $0x860] sm:$0xff]
  %v1337 = vld [vmem:[%s3 + $0x868] sm:$0xff]
  %v1338 = vld [vmem:[%s3 + $0x870] sm:$0xff]
  %v1339 = vld [vmem:[%s3 + $0x878] sm:$0xff]
  %v1340 = vld [vmem:[%s3 + $0x880] sm:$0xff]
  %v1341 = vld [vmem:[%s3 + $0x888] sm:$0xff]
  %v1342 = vld [vmem:[%s3 + $0x890] sm:$0xff]
  %v1343 = vld [vmem:[%s3 + $0x898] sm:$0xff]
  %v1344 = vld [vmem:[%s3 + $0x8a0] sm:$0xff]
  %v1345 = vld [vmem:[%s3 + $0x8a8] sm:$0xff]
  %v1346 = vld [vmem:[%s3 + $0x8b0] sm:$0xff]
  %v1347 = vld [vmem:[%s3 + $0x8b8] sm:$0xff]
  %v1348 = vld [vmem:[%s3 + $0x8c0] sm:$0xff]
  %v1349 = vld [vmem:[%s3 + $0x8c8] sm:$0xff]
  %v1350 = vld [vmem:[%s3 + $0x8d0] sm:$0xff]
  %v1351 = vld [vmem:[%s3 + $0x8d8] sm:$0xff]
  %v1352 = vld [vmem:[%s3 + $0x8e0] sm:$0xff]
  %v1353 = vld [vmem:[%s3 + $0x8e8] sm:$0xff]
  %v1354 = vld [vmem:[%s3 + $0x8f0] sm:$0xff]
  %v1355 = vld [vmem:[%s3 + $0x8f8] sm:$0xff]
  %v1356 = vld [vmem:[%s3 + $0x900] sm:$0xff]
  %v1357 = vld [vmem:[%s3 + $0x908] sm:$0xff]
  %v1358 = vld [vmem:[%s3 + $0x910] sm:$0xff]
  %v1359 = vld [vmem:[%s3 + $0x918] sm:$0xff]
  %v1360 = vld [vmem:[%s3 + $0x920] sm:$0xff]
  %v1361 = vld [vmem:[%s3 + $0x928] sm:$0xff]
  %v1362 = vld [vmem:[%s3 + $0x930] sm:$0xff]
  %v1363 = vld [vmem:[%s3 + $0x938] sm:$0xff]
  %v1364 = vld [vmem:[%s3 + $0x940] sm:$0xff]
  %v1365 = vld [vmem:[%s3 + $0x948] sm:$0xff]
  %v1366 = vld [vmem:[%s3 + $0x950] sm:$0xff]
  %v1367 = vld [vmem:[%s3 + $0x958] sm:$0xff]
  %v1368 = vld [vmem:[%s3 + $0x960] sm:$0xff]
  %v1369 = vld [vmem:[%s3 + $0x968] sm:$0xff]
  %v1370 = vld [vmem:[%s3 + $0x970] sm:$0xff]
  %v1371 = vld [vmem:[%s3 + $0x978] sm:$0xff]
  %v1372 = vld [vmem:[%s3 + $0x980] sm:$0xff]
  %v1373 = vld [vmem:[%s3 + $0x988] sm:$0xff]
  %v1374 = vld [vmem:[%s3 + $0x990] sm:$0xff]
  %v1375 = vld [vmem:[%s3 + $0x998] sm:$0xff]
  %v1376 = vld [vmem:[%s3 + $0x9a0] sm:$0xff]
  %v1377 = vld [vmem:[%s3 + $0x9a8] sm:$0xff]
  %v1378 = vld [vmem:[%s3 + $0x9b0] sm:$0xff]
  %v1379 = vld [vmem:[%s3 + $0x9b8] sm:$0xff]
  %v1380 = vld [vmem:[%s3 + $0x9c0] sm:$0xff]
  %v1381 = vld [vmem:[%s3 + $0x9c8] sm:$0xff]
  %v1382 = vld [vmem:[%s3 + $0x9d0] sm:$0xff]
  %v1383 = vld [vmem:[%s3 + $0x9d8] sm:$0xff]
  %v1384 = vld [vmem:[%s3 + $0x9e0] sm:$0xff]
  %v1385 = vld [vmem:[%s3 + $0x9e8] sm:$0xff]
  %v1386 = vld [vmem:[%s3 + $0x9f0] sm:$0xff]
  %v1387 = vld [vmem:[%s3 + $0x9f8] sm:$0xff]
  %v1388 = vld [vmem:[%s4] sm:$0xff]
  %v1389 = vld [vmem:[%s4 + $0x8] sm:$0xff]
  %v1390 = vld [vmem:[%s4 + $0x10] sm:$0xf]
  %v1394 = vlaneseq
  %v1395 = vshrl.u32 %v1394, 7
  %v1396 = vsub.s32 0, %v1395
  %v1397 = vrot.slane %v1388, %v1396
  %v1398 = vlaneseq
  %v1399 = vshrl.u32 %v1398, 7
  %v1400 = vsub.s32 1, %v1399
  %v1401 = vrot.slane %v1388, %v1400
  %v1402 = vlaneseq
  %v1403 = vshrl.u32 %v1402, 7
  %v1404 = vsub.s32 2, %v1403
  %v1405 = vrot.slane %v1388, %v1404
  %v1406 = vlaneseq
  %v1407 = vshrl.u32 %v1406, 7
  %v1408 = vsub.s32 3, %v1407
  %v1409 = vrot.slane %v1388, %v1408
  %v1410 = vlaneseq
  %v1411 = vshrl.u32 %v1410, 7
  %v1412 = vsub.s32 4, %v1411
  %v1413 = vrot.slane %v1388, %v1412
  %v1414 = vlaneseq
  %v1415 = vshrl.u32 %v1414, 7
  %v1416 = vsub.s32 5, %v1415
  %v1417 = vrot.slane %v1388, %v1416
  %v1418 = vlaneseq
  %v1419 = vshrl.u32 %v1418, 7
  %v1420 = vsub.s32 6, %v1419
  %v1421 = vrot.slane %v1388, %v1420
  %v1422 = vlaneseq
  %v1423 = vshrl.u32 %v1422, 7
  %v1424 = vsub.s32 7, %v1423
  %v1425 = vrot.slane %v1388, %v1424
  %v1426 = vlaneseq
  %v1427 = vshrl.u32 %v1426, 7
  %v1428 = vsub.s32 0, %v1427
  %v1429 = vrot.slane %v1389, %v1428
  %v1430 = vlaneseq
  %v1431 = vshrl.u32 %v1430, 7
  %v1432 = vsub.s32 1, %v1431
  %v1433 = vrot.slane %v1389, %v1432
  %v1434 = vlaneseq
  %v1435 = vshrl.u32 %v1434, 7
  %v1436 = vsub.s32 2, %v1435
  %v1437 = vrot.slane %v1389, %v1436
  %v1438 = vlaneseq
  %v1439 = vshrl.u32 %v1438, 7
  %v1440 = vsub.s32 3, %v1439
  %v1441 = vrot.slane %v1389, %v1440
  %v1442 = vlaneseq
  %v1443 = vshrl.u32 %v1442, 7
  %v1444 = vsub.s32 4, %v1443
  %v1445 = vrot.slane %v1389, %v1444
  %v1446 = vlaneseq
  %v1447 = vshrl.u32 %v1446, 7
  %v1448 = vsub.s32 5, %v1447
  %v1449 = vrot.slane %v1389, %v1448
  %v1450 = vlaneseq
  %v1451 = vshrl.u32 %v1450, 7
  %v1452 = vsub.s32 6, %v1451
  %v1453 = vrot.slane %v1389, %v1452
  %v1454 = vlaneseq
  %v1455 = vshrl.u32 %v1454, 7
  %v1456 = vsub.s32 7, %v1455
  %v1457 = vrot.slane %v1389, %v1456
  %v1458 = vlaneseq
  %v1459 = vshrl.u32 %v1458, 7
  %v1460 = vsub.s32 0, %v1459
  %v1461 = vrot.slane %v1390, %v1460
  %v1462 = vlaneseq
  %v1463 = vshrl.u32 %v1462, 7
  %v1464 = vsub.s32 1, %v1463
  %v1465 = vrot.slane %v1390, %v1464
  %v1466 = vlaneseq
  %v1467 = vshrl.u32 %v1466, 7
  %v1468 = vsub.s32 2, %v1467
  %v1469 = vrot.slane %v1390, %v1468
  %v1470 = vlaneseq
  %v1471 = vshrl.u32 %v1470, 7
  %v1472 = vsub.s32 3, %v1471
  %v1473 = vrot.slane %v1390, %v1472
  %1494 = vmatprep.subr.mxu0 %v1369
  %1495 = vmatpush1.msra.mxu0 %v1368
  %1496 = vmatprep.subr.mxu0 %v1349
  %1497 = vmatpush1.msra.mxu0 %v1348
  %1498 = vmatprep.subr.mxu0 %v1329
  %1499 = vmatpush1.msra.mxu0 %v1328
  %1500 = vmatprep.subr.mxu0 %v1309
  %1501 = vmatpush1.msra.mxu0 %v1308
  %1502 = vmatprep.subr.mxu0 %v1289
  %1503 = vmatpush1.msra.mxu0 %v1288
  %1504 = vmatprep.subr.mxu0 %v1269
  %1505 = vmatpush1.msra.mxu0 %v1268
  %1506 = vmatprep.subr.mxu0 %v1249
  %1507 = vmatpush1.msra.mxu0 %v1248
  %1508 = vmatprep.subr.mxu0 %v1229
  %1509 = vmatpush1.msra.mxu0 %v1228
  %1510 = vmatprep.subr.mxu0 %v1209
  %1511 = vmatpush1.msra.mxu0 %v1208
  %1512 = vmatprep.subr.mxu0 %v1189
  %1513 = vmatpush1.msra.mxu0 %v1188
  %1514 = vmatprep.subr.mxu0 %v1169
  %1515 = vmatpush1.msra.mxu0 %v1168
  %1516 = vmatprep.subr.mxu0 %v1149
  %1517 = vmatpush1.msra.mxu0 %v1148
  %1518 = vmatprep.subr.mxu0 %v1129
  %1519 = vmatpush1.msra.mxu0 %v1128
  %1520 = vmatprep.subr.mxu0 %v1109
  %1521 = vmatpush1.msra.mxu0 %v1108
  %1522 = vmatprep.subr.mxu0 %v1089
  %1523 = vmatpush1.msra.mxu0 %v1088
  %1524 = vmatprep.subr.mxu0 %v1069
  %1525 = vmatpush1.msra.mxu0 %v1068
  %1526 = vmatprep.subr.mxu0 0.0
  %1527 = vmatpush2.msra.mxu0 0.0
  %1528 = vmatprep.subr.mxu0 0.0
  %1529 = vmatpush2.msra.mxu0 0.0
  %1530 = vmatprep.subr.mxu0 0.0
  %1531 = vmatpush2.msra.mxu0 0.0
  %1532 = vmatprep.subr.mxu0 0.0
  %1533 = vmatpush2.msra.mxu0 0.0
  %1534 = vmatprep.subr.mxu0 0.0
  %1535 = vmatpush2.msra.mxu0 0.0
  %1536 = vmatprep.subr.mxu0 0.0
  %1537 = vmatpush2.msra.mxu0 0.0
  %1538 = vmatprep.subr.mxu0 0.0
  %1539 = vmatpush2.msra.mxu0 0.0
  %1540 = vmatprep.subr.mxu0 0.0
  %1541 = vmatpush2.msra.mxu0 0.0
  %1542 = vmatprep.subr.mxu0 0.0
  %1543 = vmatpush2.msra.mxu0 0.0
  %1544 = vmatprep.subr.mxu0 0.0
  %1545 = vmatpush2.msra.mxu0 0.0
  %1546 = vmatprep.subr.mxu0 0.0
  %1547 = vmatpush2.msra.mxu0 0.0
  %1548 = vmatprep.subr.mxu0 0.0
  %1549 = vmatpush2.msra.mxu0 0.0
  %1550 = vmatprep.subr.mxu0 0.0
  %1551 = vmatpush2.msra.mxu0 0.0
  %1552 = vmatprep.subr.mxu0 0.0
  %1553 = vmatpush2.msra.mxu0 0.0
  %1554 = vmatprep.subr.mxu0 0.0
  %1555 = vmatpush2.msra.mxu0 0.0
  %1556 = vmatprep.subr.mxu0 0.0
  %1557 = vmatpush2.msra.mxu0 0.0
  %1558 = vmatprep.mubr.f32.mxu0 0.0
  %1559 = vmatmul.mubr.f32.gmra.mxu0 %v1065
  %v1560 = vpop.f32.mrf.mxu0
  %v1561 = vadd.f32 %v1397, %v1560
  %v1562 = vpop.f32.mrf.mxu0
  %v1563 = vadd.f32 %v1401, %v1562
  %1564 = vdwg.mxu0
  %1565 = vmatprep.subr.mxu0 %v1371
  %1566 = vmatpush1.msra.mxu0 %v1370
  %1567 = vmatprep.subr.mxu0 %v1351
  %1568 = vmatpush1.msra.mxu0 %v1350
  %1569 = vmatprep.subr.mxu0 %v1331
  %1570 = vmatpush1.msra.mxu0 %v1330
  %1571 = vmatprep.subr.mxu0 %v1311
  %1572 = vmatpush1.msra.mxu0 %v1310
  %1573 = vmatprep.subr.mxu0 %v1291
  %1574 = vmatpush1.msra.mxu0 %v1290
  %1575 = vmatprep.subr.mxu0 %v1271
  %1576 = vmatpush1.msra.mxu0 %v1270
  %1577 = vmatprep.subr.mxu0 %v1251
  %1578 = vmatpush1.msra.mxu0 %v1250
  %1579 = vmatprep.subr.mxu0 %v1231
  %1580 = vmatpush1.msra.mxu0 %v1230
  %1581 = vmatprep.subr.mxu0 %v1211
  %1582 = vmatpush1.msra.mxu0 %v1210
  %1583 = vmatprep.subr.mxu0 %v1191
  %1584 = vmatpush1.msra.mxu0 %v1190
  %1585 = vmatprep.subr.mxu0 %v1171
  %1586 = vmatpush1.msra.mxu0 %v1170
  %1587 = vmatprep.subr.mxu0 %v1151
  %1588 = vmatpush1.msra.mxu0 %v1150
  %1589 = vmatprep.subr.mxu0 %v1131
  %1590 = vmatpush1.msra.mxu0 %v1130
  %1591 = vmatprep.subr.mxu0 %v1111
  %1592 = vmatpush1.msra.mxu0 %v1110
  %1593 = vmatprep.subr.mxu0 %v1091
  %1594 = vmatpush1.msra.mxu0 %v1090
  %1595 = vmatprep.subr.mxu0 %v1071
  %1596 = vmatpush1.msra.mxu0 %v1070
  %1597 = vmatprep.subr.mxu0 0.0
  %1598 = vmatpush2.msra.mxu0 0.0
  %1599 = vmatprep.subr.mxu0 0.0
  %1600 = vmatpush2.msra.mxu0 0.0
  %1601 = vmatprep.subr.mxu0 0.0
  %1602 = vmatpush2.msra.mxu0 0.0
  %1603 = vmatprep.subr.mxu0 0.0
  %1604 = vmatpush2.msra.mxu0 0.0
  %1605 = vmatprep.subr.mxu0 0.0
  %1606 = vmatpush2.msra.mxu0 0.0
  %1607 = vmatprep.subr.mxu0 0.0
  %1608 = vmatpush2.msra.mxu0 0.0
  %1609 = vmatprep.subr.mxu0 0.0
  %1610 = vmatpush2.msra.mxu0 0.0
  %1611 = vmatprep.subr.mxu0 0.0
  %1612 = vmatpush2.msra.mxu0 0.0
  %1613 = vmatprep.subr.mxu0 0.0
  %1614 = vmatpush2.msra.mxu0 0.0
  %1615 = vmatprep.subr.mxu0 0.0
  %1616 = vmatpush2.msra.mxu0 0.0
  %1617 = vmatprep.subr.mxu0 0.0
  %1618 = vmatpush2.msra.mxu0 0.0
  %1619 = vmatprep.subr.mxu0 0.0
  %1620 = vmatpush2.msra.mxu0 0.0
  %1621 = vmatprep.subr.mxu0 0.0
  %1622 = vmatpush2.msra.mxu0 0.0
  %1623 = vmatprep.subr.mxu0 0.0
  %1624 = vmatpush2.msra.mxu0 0.0
  %1625 = vmatprep.subr.mxu0 0.0
  %1626 = vmatpush2.msra.mxu0 0.0
  %1627 = vmatprep.subr.mxu0 0.0
  %1628 = vmatpush2.msra.mxu0 0.0
  %1629 = vmatprep.mubr.f32.mxu0 0.0
  %1630 = vmatmul.mubr.f32.gmra.mxu0 %v1065
  %v1631 = vpop.f32.mrf.mxu0
  %v1632 = vadd.f32 %v1405, %v1631
  %v1633 = vpop.f32.mrf.mxu0
  %v1634 = vadd.f32 %v1409, %v1633
  %1635 = vdwg.mxu0
  %1636 = vmatprep.subr.mxu0 %v1373
  %1637 = vmatpush1.msra.mxu0 %v1372
  %1638 = vmatprep.subr.mxu0 %v1353
  %1639 = vmatpush1.msra.mxu0 %v1352
  %1640 = vmatprep.subr.mxu0 %v1333
  %1641 = vmatpush1.msra.mxu0 %v1332
  %1642 = vmatprep.subr.mxu0 %v1313
  %1643 = vmatpush1.msra.mxu0 %v1312
  %1644 = vmatprep.subr.mxu0 %v1293
  %1645 = vmatpush1.msra.mxu0 %v1292
  %1646 = vmatprep.subr.mxu0 %v1273
  %1647 = vmatpush1.msra.mxu0 %v1272
  %1648 = vmatprep.subr.mxu0 %v1253
  %1649 = vmatpush1.msra.mxu0 %v1252
  %1650 = vmatprep.subr.mxu0 %v1233
  %1651 = vmatpush1.msra.mxu0 %v1232
  %1652 = vmatprep.subr.mxu0 %v1213
  %1653 = vmatpush1.msra.mxu0 %v1212
  %1654 = vmatprep.subr.mxu0 %v1193
  %1655 = vmatpush1.msra.mxu0 %v1192
  %1656 = vmatprep.subr.mxu0 %v1173
  %1657 = vmatpush1.msra.mxu0 %v1172
  %1658 = vmatprep.subr.mxu0 %v1153
  %1659 = vmatpush1.msra.mxu0 %v1152
  %1660 = vmatprep.subr.mxu0 %v1133
  %1661 = vmatpush1.msra.mxu0 %v1132
  %1662 = vmatprep.subr.mxu0 %v1113
  %1663 = vmatpush1.msra.mxu0 %v1112
  %1664 = vmatprep.subr.mxu0 %v1093
  %1665 = vmatpush1.msra.mxu0 %v1092
  %1666 = vmatprep.subr.mxu0 %v1073
  %1667 = vmatpush1.msra.mxu0 %v1072
  %1668 = vmatprep.subr.mxu0 0.0
  %1669 = vmatpush2.msra.mxu0 0.0
  %1670 = vmatprep.subr.mxu0 0.0
  %1671 = vmatpush2.msra.mxu0 0.0
  %1672 = vmatprep.subr.mxu0 0.0
  %1673 = vmatpush2.msra.mxu0 0.0
  %1674 = vmatprep.subr.mxu0 0.0
  %1675 = vmatpush2.msra.mxu0 0.0
  %1676 = vmatprep.subr.mxu0 0.0
  %1677 = vmatpush2.msra.mxu0 0.0
  %1678 = vmatprep.subr.mxu0 0.0
  %1679 = vmatpush2.msra.mxu0 0.0
  %1680 = vmatprep.subr.mxu0 0.0
  %1681 = vmatpush2.msra.mxu0 0.0
  %1682 = vmatprep.subr.mxu0 0.0
  %1683 = vmatpush2.msra.mxu0 0.0
  %1684 = vmatprep.subr.mxu0 0.0
  %1685 = vmatpush2.msra.mxu0 0.0
  %1686 = vmatprep.subr.mxu0 0.0
  %1687 = vmatpush2.msra.mxu0 0.0
  %1688 = vmatprep.subr.mxu0 0.0
  %1689 = vmatpush2.msra.mxu0 0.0
  %1690 = vmatprep.subr.mxu0 0.0
  %1691 = vmatpush2.msra.mxu0 0.0
  %1692 = vmatprep.subr.mxu0 0.0
  %1693 = vmatpush2.msra.mxu0 0.0
  %1694 = vmatprep.subr.mxu0 0.0
  %1695 = vmatpush2.msra.mxu0 0.0
  %1696 = vmatprep.subr.mxu0 0.0
  %1697 = vmatpush2.msra.mxu0 0.0
  %1698 = vmatprep.subr.mxu0 0.0
  %1699 = vmatpush2.msra.mxu0 0.0
  %1700 = vmatprep.mubr.f32.mxu0 0.0
  %1701 = vmatmul.mubr.f32.gmra.mxu0 %v1065
  %v1702 = vpop.f32.mrf.mxu0
  %v1703 = vadd.f32 %v1413, %v1702
  %v1704 = vpop.f32.mrf.mxu0
  %v1705 = vadd.f32 %v1417, %v1704
  %1706 = vdwg.mxu0
  %1707 = vmatprep.subr.mxu0 %v1375
  %1708 = vmatpush1.msra.mxu0 %v1374
  %1709 = vmatprep.subr.mxu0 %v1355
  %1710 = vmatpush1.msra.mxu0 %v1354
  %1711 = vmatprep.subr.mxu0 %v1335
  %1712 = vmatpush1.msra.mxu0 %v1334
  %1713 = vmatprep.subr.mxu0 %v1315
  %1714 = vmatpush1.msra.mxu0 %v1314
  %1715 = vmatprep.subr.mxu0 %v1295
  %1716 = vmatpush1.msra.mxu0 %v1294
  %1717 = vmatprep.subr.mxu0 %v1275
  %1718 = vmatpush1.msra.mxu0 %v1274
  %1719 = vmatprep.subr.mxu0 %v1255
  %1720 = vmatpush1.msra.mxu0 %v1254
  %1721 = vmatprep.subr.mxu0 %v1235
  %1722 = vmatpush1.msra.mxu0 %v1234
  %1723 = vmatprep.subr.mxu0 %v1215
  %1724 = vmatpush1.msra.mxu0 %v1214
  %1725 = vmatprep.subr.mxu0 %v1195
  %1726 = vmatpush1.msra.mxu0 %v1194
  %1727 = vmatprep.subr.mxu0 %v1175
  %1728 = vmatpush1.msra.mxu0 %v1174
  %1729 = vmatprep.subr.mxu0 %v1155
  %1730 = vmatpush1.msra.mxu0 %v1154
  %1731 = vmatprep.subr.mxu0 %v1135
  %1732 = vmatpush1.msra.mxu0 %v1134
  %1733 = vmatprep.subr.mxu0 %v1115
  %1734 = vmatpush1.msra.mxu0 %v1114
  %1735 = vmatprep.subr.mxu0 %v1095
  %1736 = vmatpush1.msra.mxu0 %v1094
  %1737 = vmatprep.subr.mxu0 %v1075
  %1738 = vmatpush1.msra.mxu0 %v1074
  %1739 = vmatprep.subr.mxu0 0.0
  %1740 = vmatpush2.msra.mxu0 0.0
  %1741 = vmatprep.subr.mxu0 0.0
  %1742 = vmatpush2.msra.mxu0 0.0
  %1743 = vmatprep.subr.mxu0 0.0
  %1744 = vmatpush2.msra.mxu0 0.0
  %1745 = vmatprep.subr.mxu0 0.0
  %1746 = vmatpush2.msra.mxu0 0.0
  %1747 = vmatprep.subr.mxu0 0.0
  %1748 = vmatpush2.msra.mxu0 0.0
  %1749 = vmatprep.subr.mxu0 0.0
  %1750 = vmatpush2.msra.mxu0 0.0
  %1751 = vmatprep.subr.mxu0 0.0
  %1752 = vmatpush2.msra.mxu0 0.0
  %1753 = vmatprep.subr.mxu0 0.0
  %1754 = vmatpush2.msra.mxu0 0.0
  %1755 = vmatprep.subr.mxu0 0.0
  %1756 = vmatpush2.msra.mxu0 0.0
  %1757 = vmatprep.subr.mxu0 0.0
  %1758 = vmatpush2.msra.mxu0 0.0
  %1759 = vmatprep.subr.mxu0 0.0
  %1760 = vmatpush2.msra.mxu0 0.0
  %1761 = vmatprep.subr.mxu0 0.0
  %1762 = vmatpush2.msra.mxu0 0.0
  %1763 = vmatprep.subr.mxu0 0.0
  %1764 = vmatpush2.msra.mxu0 0.0
  %1765 = vmatprep.subr.mxu0 0.0
  %1766 = vmatpush2.msra.mxu0 0.0
  %1767 = vmatprep.subr.mxu0 0.0
  %1768 = vmatpush2.msra.mxu0 0.0
  %1769 = vmatprep.subr.mxu0 0.0
  %1770 = vmatpush2.msra.mxu0 0.0
  %1771 = vmatprep.mubr.f32.mxu0 0.0
  %1772 = vmatmul.mubr.f32.gmra.mxu0 %v1065
  %v1773 = vpop.f32.mrf.mxu0
  %v1774 = vadd.f32 %v1421, %v1773
  %v1775 = vpop.f32.mrf.mxu0
  %v1776 = vadd.f32 %v1425, %v1775
  %1777 = vdwg.mxu0
  %1778 = vmatprep.subr.mxu0 %v1377
  %1779 = vmatpush1.msra.mxu0 %v1376
  %1780 = vmatprep.subr.mxu0 %v1357
  %1781 = vmatpush1.msra.mxu0 %v1356
  %1782 = vmatprep.subr.mxu0 %v1337
  %1783 = vmatpush1.msra.mxu0 %v1336
  %1784 = vmatprep.subr.mxu0 %v1317
  %1785 = vmatpush1.msra.mxu0 %v1316
  %1786 = vmatprep.subr.mxu0 %v1297
  %1787 = vmatpush1.msra.mxu0 %v1296
  %1788 = vmatprep.subr.mxu0 %v1277
  %1789 = vmatpush1.msra.mxu0 %v1276
  %1790 = vmatprep.subr.mxu0 %v1257
  %1791 = vmatpush1.msra.mxu0 %v1256
  %1792 = vmatprep.subr.mxu0 %v1237
  %1793 = vmatpush1.msra.mxu0 %v1236
  %1794 = vmatprep.subr.mxu0 %v1217
  %1795 = vmatpush1.msra.mxu0 %v1216
  %1796 = vmatprep.subr.mxu0 %v1197
  %1797 = vmatpush1.msra.mxu0 %v1196
  %1798 = vmatprep.subr.mxu0 %v1177
  %1799 = vmatpush1.msra.mxu0 %v1176
  %1800 = vmatprep.subr.mxu0 %v1157
  %1801 = vmatpush1.msra.mxu0 %v1156
  %1802 = vmatprep.subr.mxu0 %v1137
  %1803 = vmatpush1.msra.mxu0 %v1136
  %1804 = vmatprep.subr.mxu0 %v1117
  %1805 = vmatpush1.msra.mxu0 %v1116
  %1806 = vmatprep.subr.mxu0 %v1097
  %1807 = vmatpush1.msra.mxu0 %v1096
  %1808 = vmatprep.subr.mxu0 %v1077
  %1809 = vmatpush1.msra.mxu0 %v1076
  %1810 = vmatprep.subr.mxu0 0.0
  %1811 = vmatpush2.msra.mxu0 0.0
  %1812 = vmatprep.subr.mxu0 0.0
  %1813 = vmatpush2.msra.mxu0 0.0
  %1814 = vmatprep.subr.mxu0 0.0
  %1815 = vmatpush2.msra.mxu0 0.0
  %1816 = vmatprep.subr.mxu0 0.0
  %1817 = vmatpush2.msra.mxu0 0.0
  %1818 = vmatprep.subr.mxu0 0.0
  %1819 = vmatpush2.msra.mxu0 0.0
  %1820 = vmatprep.subr.mxu0 0.0
  %1821 = vmatpush2.msra.mxu0 0.0
  %1822 = vmatprep.subr.mxu0 0.0
  %1823 = vmatpush2.msra.mxu0 0.0
  %1824 = vmatprep.subr.mxu0 0.0
  %1825 = vmatpush2.msra.mxu0 0.0
  %1826 = vmatprep.subr.mxu0 0.0
  %1827 = vmatpush2.msra.mxu0 0.0
  %1828 = vmatprep.subr.mxu0 0.0
  %1829 = vmatpush2.msra.mxu0 0.0
  %1830 = vmatprep.subr.mxu0 0.0
  %1831 = vmatpush2.msra.mxu0 0.0
  %1832 = vmatprep.subr.mxu0 0.0
  %1833 = vmatpush2.msra.mxu0 0.0
  %1834 = vmatprep.subr.mxu0 0.0
  %1835 = vmatpush2.msra.mxu0 0.0
  %1836 = vmatprep.subr.mxu0 0.0
  %1837 = vmatpush2.msra.mxu0 0.0
  %1838 = vmatprep.subr.mxu0 0.0
  %1839 = vmatpush2.msra.mxu0 0.0
  %1840 = vmatprep.subr.mxu0 0.0
  %1841 = vmatpush2.msra.mxu0 0.0
  %1842 = vmatprep.mubr.f32.mxu0 0.0
  %1843 = vmatmul.mubr.f32.gmra.mxu0 %v1065
  %v1844 = vpop.f32.mrf.mxu0
  %v1845 = vadd.f32 %v1429, %v1844
  %v1846 = vpop.f32.mrf.mxu0
  %v1847 = vadd.f32 %v1433, %v1846
  %1848 = vdwg.mxu0
  %1849 = vmatprep.subr.mxu0 %v1379
  %1850 = vmatpush1.msra.mxu0 %v1378
  %1851 = vmatprep.subr.mxu0 %v1359
  %1852 = vmatpush1.msra.mxu0 %v1358
  %1853 = vmatprep.subr.mxu0 %v1339
  %1854 = vmatpush1.msra.mxu0 %v1338
  %1855 = vmatprep.subr.mxu0 %v1319
  %1856 = vmatpush1.msra.mxu0 %v1318
  %1857 = vmatprep.subr.mxu0 %v1299
  %1858 = vmatpush1.msra.mxu0 %v1298
  %1859 = vmatprep.subr.mxu0 %v1279
  %1860 = vmatpush1.msra.mxu0 %v1278
  %1861 = vmatprep.subr.mxu0 %v1259
  %1862 = vmatpush1.msra.mxu0 %v1258
  %1863 = vmatprep.subr.mxu0 %v1239
  %1864 = vmatpush1.msra.mxu0 %v1238
  %1865 = vmatprep.subr.mxu0 %v1219
  %1866 = vmatpush1.msra.mxu0 %v1218
  %1867 = vmatprep.subr.mxu0 %v1199
  %1868 = vmatpush1.msra.mxu0 %v1198
  %1869 = vmatprep.subr.mxu0 %v1179
  %1870 = vmatpush1.msra.mxu0 %v1178
  %1871 = vmatprep.subr.mxu0 %v1159
  %1872 = vmatpush1.msra.mxu0 %v1158
  %1873 = vmatprep.subr.mxu0 %v1139
  %1874 = vmatpush1.msra.mxu0 %v1138
  %1875 = vmatprep.subr.mxu0 %v1119
  %1876 = vmatpush1.msra.mxu0 %v1118
  %1877 = vmatprep.subr.mxu0 %v1099
  %1878 = vmatpush1.msra.mxu0 %v1098
  %1879 = vmatprep.subr.mxu0 %v1079
  %1880 = vmatpush1.msra.mxu0 %v1078
  %1881 = vmatprep.subr.mxu0 0.0
  %1882 = vmatpush2.msra.mxu0 0.0
  %1883 = vmatprep.subr.mxu0 0.0
  %1884 = vmatpush2.msra.mxu0 0.0
  %1885 = vmatprep.subr.mxu0 0.0
  %1886 = vmatpush2.msra.mxu0 0.0
  %1887 = vmatprep.subr.mxu0 0.0
  %1888 = vmatpush2.msra.mxu0 0.0
  %1889 = vmatprep.subr.mxu0 0.0
  %1890 = vmatpush2.msra.mxu0 0.0
  %1891 = vmatprep.subr.mxu0 0.0
  %1892 = vmatpush2.msra.mxu0 0.0
  %1893 = vmatprep.subr.mxu0 0.0
  %1894 = vmatpush2.msra.mxu0 0.0
  %1895 = vmatprep.subr.mxu0 0.0
  %1896 = vmatpush2.msra.mxu0 0.0
  %1897 = vmatprep.subr.mxu0 0.0
  %1898 = vmatpush2.msra.mxu0 0.0
  %1899 = vmatprep.subr.mxu0 0.0
  %1900 = vmatpush2.msra.mxu0 0.0
  %1901 = vmatprep.subr.mxu0 0.0
  %1902 = vmatpush2.msra.mxu0 0.0
  %1903 = vmatprep.subr.mxu0 0.0
  %1904 = vmatpush2.msra.mxu0 0.0
  %1905 = vmatprep.subr.mxu0 0.0
  %1906 = vmatpush2.msra.mxu0 0.0
  %1907 = vmatprep.subr.mxu0 0.0
  %1908 = vmatpush2.msra.mxu0 0.0
  %1909 = vmatprep.subr.mxu0 0.0
  %1910 = vmatpush2.msra.mxu0 0.0
  %1911 = vmatprep.subr.mxu0 0.0
  %1912 = vmatpush2.msra.mxu0 0.0
  %1913 = vmatprep.mubr.f32.mxu0 0.0
  %1914 = vmatmul.mubr.f32.gmra.mxu0 %v1065
  %v1915 = vpop.f32.mrf.mxu0
  %v1916 = vadd.f32 %v1437, %v1915
  %v1917 = vpop.f32.mrf.mxu0
  %v1918 = vadd.f32 %v1441, %v1917
  %1919 = vdwg.mxu0
  %1920 = vmatprep.subr.mxu0 %v1381
  %1921 = vmatpush1.msra.mxu0 %v1380
  %1922 = vmatprep.subr.mxu0 %v1361
  %1923 = vmatpush1.msra.mxu0 %v1360
  %1924 = vmatprep.subr.mxu0 %v1341
  %1925 = vmatpush1.msra.mxu0 %v1340
  %1926 = vmatprep.subr.mxu0 %v1321
  %1927 = vmatpush1.msra.mxu0 %v1320
  %1928 = vmatprep.subr.mxu0 %v1301
  %1929 = vmatpush1.msra.mxu0 %v1300
  %1930 = vmatprep.subr.mxu0 %v1281
  %1931 = vmatpush1.msra.mxu0 %v1280
  %1932 = vmatprep.subr.mxu0 %v1261
  %1933 = vmatpush1.msra.mxu0 %v1260
  %1934 = vmatprep.subr.mxu0 %v1241
  %1935 = vmatpush1.msra.mxu0 %v1240
  %1936 = vmatprep.subr.mxu0 %v1221
  %1937 = vmatpush1.msra.mxu0 %v1220
  %1938 = vmatprep.subr.mxu0 %v1201
  %1939 = vmatpush1.msra.mxu0 %v1200
  %1940 = vmatprep.subr.mxu0 %v1181
  %1941 = vmatpush1.msra.mxu0 %v1180
  %1942 = vmatprep.subr.mxu0 %v1161
  %1943 = vmatpush1.msra.mxu0 %v1160
  %1944 = vmatprep.subr.mxu0 %v1141
  %1945 = vmatpush1.msra.mxu0 %v1140
  %1946 = vmatprep.subr.mxu0 %v1121
  %1947 = vmatpush1.msra.mxu0 %v1120
  %1948 = vmatprep.subr.mxu0 %v1101
  %1949 = vmatpush1.msra.mxu0 %v1100
  %1950 = vmatprep.subr.mxu0 %v1081
  %1951 = vmatpush1.msra.mxu0 %v1080
  %1952 = vmatprep.subr.mxu0 0.0
  %1953 = vmatpush2.msra.mxu0 0.0
  %1954 = vmatprep.subr.mxu0 0.0
  %1955 = vmatpush2.msra.mxu0 0.0
  %1956 = vmatprep.subr.mxu0 0.0
  %1957 = vmatpush2.msra.mxu0 0.0
  %1958 = vmatprep.subr.mxu0 0.0
  %1959 = vmatpush2.msra.mxu0 0.0
  %1960 = vmatprep.subr.mxu0 0.0
  %1961 = vmatpush2.msra.mxu0 0.0
  %1962 = vmatprep.subr.mxu0 0.0
  %1963 = vmatpush2.msra.mxu0 0.0
  %1964 = vmatprep.subr.mxu0 0.0
  %1965 = vmatpush2.msra.mxu0 0.0
  %1966 = vmatprep.subr.mxu0 0.0
  %1967 = vmatpush2.msra.mxu0 0.0
  %1968 = vmatprep.subr.mxu0 0.0
  %1969 = vmatpush2.msra.mxu0 0.0
  %1970 = vmatprep.subr.mxu0 0.0
  %1971 = vmatpush2.msra.mxu0 0.0
  %1972 = vmatprep.subr.mxu0 0.0
  %1973 = vmatpush2.msra.mxu0 0.0
  %1974 = vmatprep.subr.mxu0 0.0
  %1975 = vmatpush2.msra.mxu0 0.0
  %1976 = vmatprep.subr.mxu0 0.0
  %1977 = vmatpush2.msra.mxu0 0.0
  %1978 = vmatprep.subr.mxu0 0.0
  %1979 = vmatpush2.msra.mxu0 0.0
  %1980 = vmatprep.subr.mxu0 0.0
  %1981 = vmatpush2.msra.mxu0 0.0
  %1982 = vmatprep.subr.mxu0 0.0
  %1983 = vmatpush2.msra.mxu0 0.0
  %1984 = vmatprep.mubr.f32.mxu0 0.0
  %1985 = vmatmul.mubr.f32.gmra.mxu0 %v1065
  %v1986 = vpop.f32.mrf.mxu0
  %v1987 = vadd.f32 %v1445, %v1986
  %v1988 = vpop.f32.mrf.mxu0
  %v1989 = vadd.f32 %v1449, %v1988
  %1990 = vdwg.mxu0
  %1991 = vmatprep.subr.mxu0 %v1383
  %1992 = vmatpush1.msra.mxu0 %v1382
  %1993 = vmatprep.subr.mxu0 %v1363
  %1994 = vmatpush1.msra.mxu0 %v1362
  %1995 = vmatprep.subr.mxu0 %v1343
  %1996 = vmatpush1.msra.mxu0 %v1342
  %1997 = vmatprep.subr.mxu0 %v1323
  %1998 = vmatpush1.msra.mxu0 %v1322
  %1999 = vmatprep.subr.mxu0 %v1303
  %2000 = vmatpush1.msra.mxu0 %v1302
  %2001 = vmatprep.subr.mxu0 %v1283
  %2002 = vmatpush1.msra.mxu0 %v1282
  %2003 = vmatprep.subr.mxu0 %v1263
  %2004 = vmatpush1.msra.mxu0 %v1262
  %2005 = vmatprep.subr.mxu0 %v1243
  %2006 = vmatpush1.msra.mxu0 %v1242
  %2007 = vmatprep.subr.mxu0 %v1223
  %2008 = vmatpush1.msra.mxu0 %v1222
  %2009 = vmatprep.subr.mxu0 %v1203
  %2010 = vmatpush1.msra.mxu0 %v1202
  %2011 = vmatprep.subr.mxu0 %v1183
  %2012 = vmatpush1.msra.mxu0 %v1182
  %2013 = vmatprep.subr.mxu0 %v1163
  %2014 = vmatpush1.msra.mxu0 %v1162
  %2015 = vmatprep.subr.mxu0 %v1143
  %2016 = vmatpush1.msra.mxu0 %v1142
  %2017 = vmatprep.subr.mxu0 %v1123
  %2018 = vmatpush1.msra.mxu0 %v1122
  %2019 = vmatprep.subr.mxu0 %v1103
  %2020 = vmatpush1.msra.mxu0 %v1102
  %2021 = vmatprep.subr.mxu0 %v1083
  %2022 = vmatpush1.msra.mxu0 %v1082
  %2023 = vmatprep.subr.mxu0 0.0
  %2024 = vmatpush2.msra.mxu0 0.0
  %2025 = vmatprep.subr.mxu0 0.0
  %2026 = vmatpush2.msra.mxu0 0.0
  %2027 = vmatprep.subr.mxu0 0.0
  %2028 = vmatpush2.msra.mxu0 0.0
  %2029 = vmatprep.subr.mxu0 0.0
  %2030 = vmatpush2.msra.mxu0 0.0
  %2031 = vmatprep.subr.mxu0 0.0
  %2032 = vmatpush2.msra.mxu0 0.0
  %2033 = vmatprep.subr.mxu0 0.0
  %2034 = vmatpush2.msra.mxu0 0.0
  %2035 = vmatprep.subr.mxu0 0.0
  %2036 = vmatpush2.msra.mxu0 0.0
  %2037 = vmatprep.subr.mxu0 0.0
  %2038 = vmatpush2.msra.mxu0 0.0
  %2039 = vmatprep.subr.mxu0 0.0
  %2040 = vmatpush2.msra.mxu0 0.0
  %2041 = vmatprep.subr.mxu0 0.0
  %2042 = vmatpush2.msra.mxu0 0.0
  %2043 = vmatprep.subr.mxu0 0.0
  %2044 = vmatpush2.msra.mxu0 0.0
  %2045 = vmatprep.subr.mxu0 0.0
  %2046 = vmatpush2.msra.mxu0 0.0
  %2047 = vmatprep.subr.mxu0 0.0
  %2048 = vmatpush2.msra.mxu0 0.0
  %2049 = vmatprep.subr.mxu0 0.0
  %2050 = vmatpush2.msra.mxu0 0.0
  %2051 = vmatprep.subr.mxu0 0.0
  %2052 = vmatpush2.msra.mxu0 0.0
  %2053 = vmatprep.subr.mxu0 0.0
  %2054 = vmatpush2.msra.mxu0 0.0
  %2055 = vmatprep.mubr.f32.mxu0 0.0
  %2056 = vmatmul.mubr.f32.gmra.mxu0 %v1065
  %v2057 = vpop.f32.mrf.mxu0
  %v2058 = vadd.f32 %v1453, %v2057
  %v2059 = vpop.f32.mrf.mxu0
  %v2060 = vadd.f32 %v1457, %v2059
  %2061 = vdwg.mxu0
  %2062 = vmatprep.subr.mxu0 %v1385
  %2063 = vmatpush1.msra.mxu0 %v1384
  %2064 = vmatprep.subr.mxu0 %v1365
  %2065 = vmatpush1.msra.mxu0 %v1364
  %2066 = vmatprep.subr.mxu0 %v1345
  %2067 = vmatpush1.msra.mxu0 %v1344
  %2068 = vmatprep.subr.mxu0 %v1325
  %2069 = vmatpush1.msra.mxu0 %v1324
  %2070 = vmatprep.subr.mxu0 %v1305
  %2071 = vmatpush1.msra.mxu0 %v1304
  %2072 = vmatprep.subr.mxu0 %v1285
  %2073 = vmatpush1.msra.mxu0 %v1284
  %2074 = vmatprep.subr.mxu0 %v1265
  %2075 = vmatpush1.msra.mxu0 %v1264
  %2076 = vmatprep.subr.mxu0 %v1245
  %2077 = vmatpush1.msra.mxu0 %v1244
  %2078 = vmatprep.subr.mxu0 %v1225
  %2079 = vmatpush1.msra.mxu0 %v1224
  %2080 = vmatprep.subr.mxu0 %v1205
  %2081 = vmatpush1.msra.mxu0 %v1204
  %2082 = vmatprep.subr.mxu0 %v1185
  %2083 = vmatpush1.msra.mxu0 %v1184
  %2084 = vmatprep.subr.mxu0 %v1165
  %2085 = vmatpush1.msra.mxu0 %v1164
  %2086 = vmatprep.subr.mxu0 %v1145
  %2087 = vmatpush1.msra.mxu0 %v1144
  %2088 = vmatprep.subr.mxu0 %v1125
  %2089 = vmatpush1.msra.mxu0 %v1124
  %2090 = vmatprep.subr.mxu0 %v1105
  %2091 = vmatpush1.msra.mxu0 %v1104
  %2092 = vmatprep.subr.mxu0 %v1085
  %2093 = vmatpush1.msra.mxu0 %v1084
  %2094 = vmatprep.subr.mxu0 0.0
  %2095 = vmatpush2.msra.mxu0 0.0
  %2096 = vmatprep.subr.mxu0 0.0
  %2097 = vmatpush2.msra.mxu0 0.0
  %2098 = vmatprep.subr.mxu0 0.0
  %2099 = vmatpush2.msra.mxu0 0.0
  %2100 = vmatprep.subr.mxu0 0.0
  %2101 = vmatpush2.msra.mxu0 0.0
  %2102 = vmatprep.subr.mxu0 0.0
  %2103 = vmatpush2.msra.mxu0 0.0
  %2104 = vmatprep.subr.mxu0 0.0
  %2105 = vmatpush2.msra.mxu0 0.0
  %2106 = vmatprep.subr.mxu0 0.0
  %2107 = vmatpush2.msra.mxu0 0.0
  %2108 = vmatprep.subr.mxu0 0.0
  %2109 = vmatpush2.msra.mxu0 0.0
  %2110 = vmatprep.subr.mxu0 0.0
  %2111 = vmatpush2.msra.mxu0 0.0
  %2112 = vmatprep.subr.mxu0 0.0
  %2113 = vmatpush2.msra.mxu0 0.0
  %2114 = vmatprep.subr.mxu0 0.0
  %2115 = vmatpush2.msra.mxu0 0.0
  %2116 = vmatprep.subr.mxu0 0.0
  %2117 = vmatpush2.msra.mxu0 0.0
  %2118 = vmatprep.subr.mxu0 0.0
  %2119 = vmatpush2.msra.mxu0 0.0
  %2120 = vmatprep.subr.mxu0 0.0
  %2121 = vmatpush2.msra.mxu0 0.0
  %2122 = vmatprep.subr.mxu0 0.0
  %2123 = vmatpush2.msra.mxu0 0.0
  %2124 = vmatprep.subr.mxu0 0.0
  %2125 = vmatpush2.msra.mxu0 0.0
  %2126 = vmatprep.mubr.f32.mxu0 0.0
  %2127 = vmatmul.mubr.f32.gmra.mxu0 %v1065
  %v2128 = vpop.f32.mrf.mxu0
  %v2129 = vadd.f32 %v1461, %v2128
  %v2130 = vpop.f32.mrf.mxu0
  %v2131 = vadd.f32 %v1465, %v2130
  %2132 = vdwg.mxu0
  %2133 = vmatprep.subr.mxu0 %v1387
  %2134 = vmatpush1.msra.mxu0 %v1386
  %2135 = vmatprep.subr.mxu0 %v1367
  %2136 = vmatpush1.msra.mxu0 %v1366
  %2137 = vmatprep.subr.mxu0 %v1347
  %2138 = vmatpush1.msra.mxu0 %v1346
  %2139 = vmatprep.subr.mxu0 %v1327
  %2140 = vmatpush1.msra.mxu0 %v1326
  %2141 = vmatprep.subr.mxu0 %v1307
  %2142 = vmatpush1.msra.mxu0 %v1306
  %2143 = vmatprep.subr.mxu0 %v1287
  %2144 = vmatpush1.msra.mxu0 %v1286
  %2145 = vmatprep.subr.mxu0 %v1267
  %2146 = vmatpush1.msra.mxu0 %v1266
  %2147 = vmatprep.subr.mxu0 %v1247
  %2148 = vmatpush1.msra.mxu0 %v1246
  %2149 = vmatprep.subr.mxu0 %v1227
  %2150 = vmatpush1.msra.mxu0 %v1226
  %2151 = vmatprep.subr.mxu0 %v1207
  %2152 = vmatpush1.msra.mxu0 %v1206
  %2153 = vmatprep.subr.mxu0 %v1187
  %2154 = vmatpush1.msra.mxu0 %v1186
  %2155 = vmatprep.subr.mxu0 %v1167
  %2156 = vmatpush1.msra.mxu0 %v1166
  %2157 = vmatprep.subr.mxu0 %v1147
  %2158 = vmatpush1.msra.mxu0 %v1146
  %2159 = vmatprep.subr.mxu0 %v1127
  %2160 = vmatpush1.msra.mxu0 %v1126
  %2161 = vmatprep.subr.mxu0 %v1107
  %2162 = vmatpush1.msra.mxu0 %v1106
  %2163 = vmatprep.subr.mxu0 %v1087
  %2164 = vmatpush1.msra.mxu0 %v1086
  %2165 = vmatprep.subr.mxu0 0.0
  %2166 = vmatpush2.msra.mxu0 0.0
  %2167 = vmatprep.subr.mxu0 0.0
  %2168 = vmatpush2.msra.mxu0 0.0
  %2169 = vmatprep.subr.mxu0 0.0
  %2170 = vmatpush2.msra.mxu0 0.0
  %2171 = vmatprep.subr.mxu0 0.0
  %2172 = vmatpush2.msra.mxu0 0.0
  %2173 = vmatprep.subr.mxu0 0.0
  %2174 = vmatpush2.msra.mxu0 0.0
  %2175 = vmatprep.subr.mxu0 0.0
  %2176 = vmatpush2.msra.mxu0 0.0
  %2177 = vmatprep.subr.mxu0 0.0
  %2178 = vmatpush2.msra.mxu0 0.0
  %2179 = vmatprep.subr.mxu0 0.0
  %2180 = vmatpush2.msra.mxu0 0.0
  %2181 = vmatprep.subr.mxu0 0.0
  %2182 = vmatpush2.msra.mxu0 0.0
  %2183 = vmatprep.subr.mxu0 0.0
  %2184 = vmatpush2.msra.mxu0 0.0
  %2185 = vmatprep.subr.mxu0 0.0
  %2186 = vmatpush2.msra.mxu0 0.0
  %2187 = vmatprep.subr.mxu0 0.0
  %2188 = vmatpush2.msra.mxu0 0.0
  %2189 = vmatprep.subr.mxu0 0.0
  %2190 = vmatpush2.msra.mxu0 0.0
  %2191 = vmatprep.subr.mxu0 0.0
  %2192 = vmatpush2.msra.mxu0 0.0
  %2193 = vmatprep.subr.mxu0 0.0
  %2194 = vmatpush2.msra.mxu0 0.0
  %2195 = vmatprep.subr.mxu0 0.0
  %2196 = vmatpush2.msra.mxu0 0.0
  %2197 = vmatprep.mubr.f32.mxu0 0.0
  %2198 = vmatmul.mubr.f32.gmra.mxu0 %v1065
  %v2199 = vpop.f32.mrf.mxu0
  %v2200 = vadd.f32 %v1469, %v2199
  %v2201 = vpop.f32.mrf.mxu0
  %v2202 = vadd.f32 %v1473, %v2201
  %2203 = vdwg.mxu0
  %2204 = vst [vmem:[%s5] sm:$0xff] %v1561
  %2205 = vst [vmem:[%s5 + $0x8] sm:$0xff] %v1563
  %2206 = vst [vmem:[%s5 + $0x10] sm:$0xff] %v1632
  %2207 = vst [vmem:[%s5 + $0x18] sm:$0xff] %v1634
  %2208 = vst [vmem:[%s5 + $0x20] sm:$0xff] %v1703
  %2209 = vst [vmem:[%s5 + $0x28] sm:$0xff] %v1705
  %2210 = vst [vmem:[%s5 + $0x30] sm:$0xff] %v1774
  %2211 = vst [vmem:[%s5 + $0x38] sm:$0xff] %v1776
  %2212 = vst [vmem:[%s5 + $0x40] sm:$0xff] %v1845
  %2213 = vst [vmem:[%s5 + $0x48] sm:$0xff] %v1847
  %2214 = vst [vmem:[%s5 + $0x50] sm:$0xff] %v1916
  %2215 = vst [vmem:[%s5 + $0x58] sm:$0xff] %v1918
  %2216 = vst [vmem:[%s5 + $0x60] sm:$0xff] %v1987
  %2217 = vst [vmem:[%s5 + $0x68] sm:$0xff] %v1989
  %2218 = vst [vmem:[%s5 + $0x70] sm:$0xff] %v2058
  %2219 = vst [vmem:[%s5 + $0x78] sm:$0xff] %v2060
  %2220 = vst [vmem:[%s5 + $0x80] sm:$0xff] %v2129
  %2221 = vst [vmem:[%s5 + $0x88] sm:$0xff] %v2131
  %2222 = vst [vmem:[%s5 + $0x90] sm:$0xff] %v2200
  %2223 = vst [vmem:[%s5 + $0x98] sm:$0xff] %v2202
  // Predicated region
  $region22: #{dense_autoencoder_forward.1} parent=0 // pred_check
    _
  $region23: #{dense_autoencoder_forward.1} parent=0 // pred_check_branch
    %2225 = sbr.rel (0) target = $region25
  $region24: #{dense_autoencoder_forward.1} parent=0 // pred_region
    _
  $region25: #{dense_autoencoder_forward.1} parent=0 // pred_fallthru
    _
  // Predicated region
  $region26: #{dense_autoencoder_forward.1} parent=0 // pred_check
    _
  $region27: #{dense_autoencoder_forward.1} parent=0 // pred_check_branch
    %2227 = sbr.rel (0) target = $region29
  $region28: #{dense_autoencoder_forward.1} parent=0 // pred_region
    _
  $region29: #{dense_autoencoder_forward.1} parent=0 // pred_fallthru
    _

</llo_original>
